<compile_context>
chip_gen: v6e
topology: v6e:2x2x1
jax: 0.10.0
libtpu: 0.0.40
codegen_flags: <defaults>
</compile_context>

<pallas_src>
import math

import jax
import jax.numpy as jnp
from jax.experimental import pallas as pl
from jax.experimental.pallas import tpu as pltpu  # noqa: F401  (not required for this gridless kernel)

# ---------------- problem sizes (small, consistent with the module) ----------
N = 2          # batch
S = 8          # sequence length (x, value, key all use S)
E = 32         # embed_size
H = 4          # heads
D = E // H     # head_dim
F = 4          # forward_expansion
FE = F * E     # FFN hidden (=128, lane-dense)
NS = N * S     # flattened rows
HNS = H * NS   # head-blocked energy columns
EPS = 1e-5     # nn.LayerNorm default eps
NEG = -1e30    # additive mask bias; must stay far below f32 exp underflow
LANES = 128    # slab lane width (lane-dense DMA)


# ---------------- slab layouts (static, shared by wrapper and kernel) --------
def _layout(items):
    offs, r = {}, 0
    for name, rows, cols in items:
        offs[name] = (r, rows, cols)
        r += ((rows + 7) // 8) * 8          # keep every item 8-row aligned
    return offs, r


_W_ITEMS = (
    ("rowmask", HNS, E),        # head indicator: also the softmax-denominator weight
    ("rowmask2", HNS, 2 * E),   # [rowmask | rowmask] for the joint K|V expansion
    ("w_qkv1", E, 3 * E), ("wo1", E, E), ("bo1", 1, E),
    ("w_q2", E, E), ("w_kv2", E, 2 * E), ("wo2", E, E), ("bo2", 1, E),
    ("w1", E, FE), ("b1", 1, FE), ("w2", FE, E), ("b2", 1, E),
    ("lng0", 1, E), ("lng1", 1, E), ("lng2", 1, E),
    ("lnb0", 1, E), ("lnb1", 1, E), ("lnb2", 1, E),
)
W_OFF, W_ROWS = _layout(_W_ITEMS)

_D_ITEMS = (
    ("xx", NS, E),              # x, flattened
    ("kv", 2 * NS, E),          # [key ; value] row-stacked
    ("bias1", NS, HNS),         # additive trg-mask bias (also masks cross-batch)
    ("bias2", NS, HNS),         # additive src-mask bias
)
D_OFF, D_ROWS = _layout(_D_ITEMS)


def _pack(offs, total_rows, arrays):
    """Pack named (rows, cols) blocks into a lane-dense (total_rows, 128) slab."""
    slab = jnp.zeros((total_rows, LANES), jnp.float32)
    for name, (r0, rows, cols) in offs.items():
        a = jnp.asarray(arrays[name], jnp.float32).reshape(rows, cols)
        slab = slab.at[r0:r0 + rows, 0:cols].set(a)
    return slab


def _view(ref, offs, name):
    r0, rows, cols = offs[name]
    return ref[r0:r0 + rows, 0:cols]


# ---------------- Pallas kernel ----------------------------------------------
def decoder_block_kernel(d_ref, w_ref, out_ref):
    f32 = jnp.float32
    dg = lambda name: _view(d_ref, D_OFF, name)
    wg = lambda name: _view(w_ref, W_OFF, name)

    xx = dg("xx")                     # (NS, E)
    rowmask = wg("rowmask")           # (HNS, E)
    rowmask2 = wg("rowmask2")         # (HNS, 2E)

    def layernorm(z, g, b):
        mu = jnp.mean(z, axis=-1, keepdims=True)
        var = jnp.mean((z - mu) * (z - mu), axis=-1, keepdims=True)
        return (z - mu) * jax.lax.rsqrt(var + EPS) * g + b

    def attention(q, kv, bias, wo, bo):
        # q: (NS, E) head-blocked columns, 1/sqrt(E) folded into the weights.
        # kv: (NS, 2E) adjacent [K|V] head-blocked columns.  Joint head
        # expansion: one sublane tile + one mask multiply for K and V.
        kv_bd = jnp.concatenate([kv] * H, axis=0) * rowmask2        # (HNS, 2E)
        # energy[r, (h, n', j)] = q_h(r) . k_h(n', j): contract the LAST dim
        # of both operands (MXU transposed-operand load; no materialized k.T).
        energy = jax.lax.dot_general(
            q, kv_bd[:, :E], (((1,), (1,)), ((), ())),
            preferred_element_type=f32) + bias                      # (NS, HNS)
        # NOTE: per-row max is taken over ALL heads/batches; shift-invariant
        # and exact here, but with real checkpoints a >~88 logit spread across
        # heads would underflow the smaller head (documented assumption).
        m = jnp.max(energy, axis=-1, keepdims=True)
        p = jnp.exp(energy - m)                    # masked / cross-batch -> 0.0
        # flash-style post-normalization: PV with unnormalized p; the
        # per-(row, head) denominator lands already broadcast over head
        # columns via the (HNS, E) head-indicator matmul and its reciprocal
        # overlaps the PV matmul instead of gating it.
        heads = jnp.dot(p, kv_bd[:, E:], preferred_element_type=f32)    # (NS, E)
        denom = jnp.dot(p, rowmask, preferred_element_type=f32)         # (NS, E)
        inv = pl.reciprocal(jnp.maximum(denom, 1e-30), approx=False)
        return jnp.dot(heads * inv, wo, preferred_element_type=f32) + bo

    # ---- decoder masked self-attention on x (fused Q|K|V projection) -------
    qkv1 = jnp.dot(xx, wg("w_qkv1"), preferred_element_type=f32)    # (NS, 3E)
    a1 = attention(qkv1[:, :E], qkv1[:, E:], dg("bias1"), wg("wo1"), wg("bo1"))
    # query = dropout(norm(attention + x)); dropout = identity at inference
    query = layernorm(a1 + xx, wg("lng0"), wg("lnb0"))

    # ---- TransformerBlock: cross-attention (fused, zero-free K|V proj) -----
    q2 = jnp.dot(query, wg("w_q2"), preferred_element_type=f32)     # (NS, E)
    kvp = jnp.dot(dg("kv"), wg("w_kv2"), preferred_element_type=f32)  # (2NS, 2E)
    kv2 = jnp.concatenate([kvp[:NS, :E], kvp[NS:, E:]], axis=1)       # (NS, 2E)
    a2 = attention(q2, kv2, dg("bias2"), wg("wo2"), wg("bo2"))
    x2 = layernorm(a2 + query, wg("lng1"), wg("lnb1"))

    # ---- feed-forward -------------------------------------------------------
    h = jnp.dot(x2, wg("w1"), preferred_element_type=f32) + wg("b1")
    h = jnp.maximum(h, 0.0)
    ff = jnp.dot(h, wg("w2"), preferred_element_type=f32) + wg("b2")

    out_ref[...] = layernorm(ff + x2, wg("lng2"), wg("lnb2"))


# ---------------- wrapper-side constant / bias builders -----------------------
def _head_masks():
    col = jnp.arange(HNS)
    e = jnp.arange(E)
    # rowmask[(h, n, j), e] = 1 iff embedding column e belongs to head h
    rowmask = (e[None, :] // D == col[:, None] // NS).astype(jnp.float32)
    rowmask2 = jnp.concatenate([rowmask, rowmask], axis=1)          # (HNS, 2E)
    return rowmask, rowmask2


def _make_bias(mask):
    """mask: (N, S_q, S_k), 0 = masked.  Returns additive bias (NS, HNS) that
    also masks the cross-batch blocks of the head/batch-batched energy."""
    rows = jnp.arange(NS)                 # query flat index n*S + i
    cols = jnp.arange(HNS)                # key flat index  h*NS + n'*S + j
    qn, qi = rows // S, rows % S
    kn, kj = (cols % NS) // S, cols % S
    same_batch = qn[:, None] == kn[None, :]
    allowed = mask[qn[:, None], qi[:, None], kj[None, :]] != 0.0
    return jnp.where(same_batch & allowed, 0.0, NEG).astype(jnp.float32)


# ---------------- wrapper -----------------------------------------------------
@jax.jit
def decoder_block(x, value, key, trg_mask, src_mask, w_slab):
    data = dict(
        xx=x.reshape(NS, E),
        kv=jnp.concatenate([key.reshape(NS, E), value.reshape(NS, E)], axis=0),
        bias1=_make_bias(trg_mask),
        bias2=_make_bias(src_mask),
    )
    d_slab = _pack(D_OFF, D_ROWS, data)   # one lane-dense per-call data slab
    # Single gridless invocation: both slabs become whole-array VMEM blocks.
    out = pl.pallas_call(
        decoder_block_kernel,
        out_shape=jax.ShapeDtypeStruct((NS, E), jnp.float32),
    )(d_slab, w_slab)
    return out.reshape(N, S, E)


# ---------------- deterministic parameter init --------------------------------
def make_params(rng):
    ks = jax.random.split(rng, 16)

    def lin(k, shape, scale=0.1):
        return jax.random.normal(k, shape, jnp.float32) * scale

    # per-head projection weights (D, D), as in nn.Linear(head_dim, head_dim)
    wq1, wk1, wv1 = lin(ks[0], (D, D)), lin(ks[1], (D, D)), lin(ks[2], (D, D))
    wq2, wk2, wv2 = lin(ks[3], (D, D)), lin(ks[4], (D, D)), lin(ks[5], (D, D))
    # fc_out: nn.Linear(E, E) with bias
    wo1, bo1 = lin(ks[6], (E, E)), lin(ks[7], (1, E))
    wo2, bo2 = lin(ks[8], (E, E)), lin(ks[9], (1, E))
    # layernorms: [decoder.norm, tb.norm1, tb.norm2]
    lng = jnp.ones((3, E), jnp.float32) + lin(ks[10], (3, E), 0.01)
    lnb = lin(ks[11], (3, E), 0.01)
    # FFN
    w1, b1 = lin(ks[12], (FE, E)), lin(ks[13], (1, FE))
    w2, b2 = lin(ks[14], (E, FE)), lin(ks[15], (1, E))

    eye_h = jnp.eye(H, dtype=jnp.float32)
    blk = lambda w: jnp.kron(eye_h, w.T)      # block-diag of W.T -> (E, E)
    scale = 1.0 / math.sqrt(E)                # torch divides by sqrt(embed_size)
    rowmask, rowmask2 = _head_masks()

    arrays = dict(
        rowmask=rowmask, rowmask2=rowmask2,
        # fused Q|K|V projection, softmax scale folded into the Q block
        w_qkv1=jnp.concatenate([blk(wq1) * scale, blk(wk1), blk(wv1)], axis=1),
        wo1=wo1.T, bo1=bo1,
        w_q2=blk(wq2) * scale,
        # fused, zero-free K|V projection for the row-stacked [key;value] input
        w_kv2=jnp.concatenate([blk(wk2), blk(wv2)], axis=1),        # (E, 2E)
        wo2=wo2.T, bo2=bo2,
        w1=w1.T, b1=b1, w2=w2.T, b2=b2,
        lng0=lng[0:1], lng1=lng[1:2], lng2=lng[2:3],
        lnb0=lnb[0:1], lnb1=lnb[1:2], lnb2=lnb[2:3],
    )
    w_slab = _pack(W_OFF, W_ROWS, arrays)     # one lane-dense weight slab

    raw = dict(wq1=wq1, wk1=wk1, wv1=wv1, wo1=wo1, bo1=bo1,
               wq2=wq2, wk2=wk2, wv2=wv2, wo2=wo2, bo2=bo2,
               lng=lng, lnb=lnb, w1=w1, b1=b1, w2=w2, b2=b2)
    return w_slab, raw


# ---------------- pure-JAX reference (mirrors the PyTorch forward) -------------
def _ref_self_attention(values, keys, query, mask, wv, wk, wq, wo, bo):
    n = query.shape[0]
    vl, kl, ql = values.shape[1], keys.shape[1], query.shape[1]
    v = values.reshape(n, vl, H, D) @ wv.T
    k = keys.reshape(n, kl, H, D) @ wk.T
    q = query.reshape(n, ql, H, D) @ wq.T
    energy = jnp.einsum("nqhd,nkhd->nhqk", q, k)
    energy = jnp.where(mask[:, None, :, :] == 0.0, -1e20, energy)
    attn = jax.nn.softmax(energy / math.sqrt(E), axis=3)
    out = jnp.einsum("nhql,nlhd->nqhd", attn, v).reshape(n, ql, E)
    return out @ wo.T + bo


def _ref_layernorm(x, g, b):
    mu = x.mean(-1, keepdims=True)
    var = ((x - mu) ** 2).mean(-1, keepdims=True)
    return (x - mu) / jnp.sqrt(var + EPS) * g + b


def decoder_block_ref(x, value, key, src_mask, trg_mask, r):
    attn = _ref_self_attention(x, x, x, trg_mask, r["wv1"], r["wk1"], r["wq1"],
                               r["wo1"], r["bo1"])
    query = _ref_layernorm(attn + x, r["lng"][0], r["lnb"][0])
    attn2 = _ref_self_attention(value, key, query, src_mask, r["wv2"], r["wk2"],
                                r["wq2"], r["wo2"], r["bo2"])
    x2 = _ref_layernorm(attn2 + query, r["lng"][1], r["lnb"][1])
    ff = jnp.maximum(x2 @ r["w1"].T + r["b1"], 0.0) @ r["w2"].T + r["b2"]
    return _ref_layernorm(ff + x2, r["lng"][2], r["lnb"][2])


# ---------------- main ---------------------------------------------------------
if __name__ == "__main__":
    root = jax.random.PRNGKey(0)
    k_x, k_v, k_k, k_p = jax.random.split(root, 4)

    x = jax.random.normal(k_x, (N, S, E), jnp.float32)
    value = jax.random.normal(k_v, (N, S, E), jnp.float32)
    key = jax.random.normal(k_k, (N, S, E), jnp.float32)

    # trg_mask: causal; src_mask: all ones (both broadcast over heads)
    trg_mask = jnp.broadcast_to(
        jnp.tril(jnp.ones((S, S), jnp.float32)), (N, S, S))
    src_mask = jnp.ones((N, S, S), jnp.float32)

    w_slab, raw = make_params(k_p)

    out = decoder_block(x, value, key, trg_mask, src_mask, w_slab)
    out = jax.block_until_ready(out)

    ref = decoder_block_ref(x, value, key, src_mask, trg_mask, raw)
    assert out.shape == (N, S, E)
    assert jnp.allclose(out, ref, rtol=1e-4, atol=1e-4), (
        float(jnp.max(jnp.abs(out - ref))))

    print("KERNEL_OK")
</pallas_src>

<mosaic_0001>
module attributes {stable_mosaic.version = 11 : i64} {
  func.func @decoder_block_kernel(%arg0: memref<80x128xf32, #tpu.memory_space<vmem>>, %arg1: memref<528x128xf32, #tpu.memory_space<vmem>>, %arg2: memref<16x32xf32, #tpu.memory_space<vmem>>) attributes {dimension_semantics = [], scalar_prefetch = 0 : i64, scratch_operands = 0 : i64, tpu.core_type = #tpu.core_type<tc>} {
    %c0 = arith.constant 0 : index
    %c0_0 = arith.constant 0 : index
    %0 = vector.load %arg0[%c0, %c0_0] : memref<80x128xf32, #tpu.memory_space<vmem>>, vector<16x32xf32>
    %c0_1 = arith.constant 0 : index
    %c0_2 = arith.constant 0 : index
    %1 = vector.load %arg1[%c0_1, %c0_2] : memref<528x128xf32, #tpu.memory_space<vmem>>, vector<64x32xf32>
    %c64 = arith.constant 64 : index
    %c0_3 = arith.constant 0 : index
    %2 = vector.load %arg1[%c64, %c0_3] : memref<528x128xf32, #tpu.memory_space<vmem>>, vector<64x64xf32>
    %c128 = arith.constant 128 : index
    %c0_4 = arith.constant 0 : index
    %3 = vector.load %arg1[%c128, %c0_4] : memref<528x128xf32, #tpu.memory_space<vmem>>, vector<32x96xf32>
    %cst = arith.constant dense<0.000000e+00> : vector<16x96xf32>
    %4 = tpu.matmul %0, %3, %cst {dimension_numbers = #tpu.dot_dimension_numbers<[1], [0], [0], [1], [0, 0, 1, 1], [], []>} : vector<16x32xf32>, vector<32x96xf32>, vector<16x96xf32> -> vector<16x96xf32>
    %5 = vector.extract_strided_slice %4 {offsets = [0, 0], sizes = [16, 32], strides = [1, 1]} : vector<16x96xf32> to vector<16x32xf32>
    %6 = vector.extract_strided_slice %4 {offsets = [0, 32], sizes = [16, 64], strides = [1, 1]} : vector<16x96xf32> to vector<16x64xf32>
    %c48 = arith.constant 48 : index
    %c0_5 = arith.constant 0 : index
    %7 = vector.load %arg0[%c48, %c0_5] : memref<80x128xf32, #tpu.memory_space<vmem>>, vector<16x64xf32>
    %c160 = arith.constant 160 : index
    %c0_6 = arith.constant 0 : index
    %8 = vector.load %arg1[%c160, %c0_6] : memref<528x128xf32, #tpu.memory_space<vmem>>, vector<32x32xf32>
    %c192 = arith.constant 192 : index
    %c0_7 = arith.constant 0 : index
    %9 = vector.load %arg1[%c192, %c0_7] : memref<528x128xf32, #tpu.memory_space<vmem>>, vector<1x32xf32>
    %10 = tpu.concatenate %6, %6, %6, %6 in 0 : vector<16x64xf32>, vector<16x64xf32>, vector<16x64xf32>, vector<16x64xf32> -> vector<64x64xf32>
    %11 = arith.mulf %10, %2 : vector<64x64xf32>
    %12 = vector.extract_strided_slice %11 {offsets = [0, 0], sizes = [64, 32], strides = [1, 1]} : vector<64x64xf32> to vector<64x32xf32>
    %cst_8 = arith.constant dense<0.000000e+00> : vector<16x64xf32>
    %13 = tpu.matmul %5, %12, %cst_8 {dimension_numbers = #tpu.dot_dimension_numbers<[1], [1], [0], [0], [0, 0, 1, 0], [], []>} : vector<16x32xf32>, vector<64x32xf32>, vector<16x64xf32> -> vector<16x64xf32>
    %14 = arith.addf %13, %7 : vector<16x64xf32>
    %cst_9 = arith.constant dense<0xFF800000> : vector<16xf32>
    %15 = vector.multi_reduction <maximumf>, %14, %cst_9 [1] : vector<16x64xf32> to vector<16xf32>
    %16 = vector.shape_cast %15 : vector<16xf32> to vector<16x1xf32>
    %17 = vector.broadcast %16 : vector<16x1xf32> to vector<16x64xf32>
    %18 = arith.subf %14, %17 : vector<16x64xf32>
    %19 = math.exp %18 : vector<16x64xf32>
    %20 = vector.extract_strided_slice %11 {offsets = [0, 32], sizes = [64, 32], strides = [1, 1]} : vector<64x64xf32> to vector<64x32xf32>
    %cst_10 = arith.constant dense<0.000000e+00> : vector<16x32xf32>
    %21 = tpu.matmul %19, %20, %cst_10 {dimension_numbers = #tpu.dot_dimension_numbers<[1], [0], [0], [1], [0, 0, 1, 1], [], []>} : vector<16x64xf32>, vector<64x32xf32>, vector<16x32xf32> -> vector<16x32xf32>
    %cst_11 = arith.constant dense<0.000000e+00> : vector<16x32xf32>
    %22 = tpu.matmul %19, %1, %cst_11 {dimension_numbers = #tpu.dot_dimension_numbers<[1], [0], [0], [1], [0, 0, 1, 1], [], []>} : vector<16x64xf32>, vector<64x32xf32>, vector<16x32xf32> -> vector<16x32xf32>
    %cst_12 = arith.constant 1.000000e-30 : f32
    %23 = vector.broadcast %cst_12 : f32 to vector<16x32xf32>
    %24 = arith.maximumf %22, %23 : vector<16x32xf32>
    %25 = tpu.reciprocal %24 : vector<16x32xf32> -> vector<16x32xf32>
    %26 = arith.mulf %21, %25 : vector<16x32xf32>
    %cst_13 = arith.constant dense<0.000000e+00> : vector<16x32xf32>
    %27 = tpu.matmul %26, %8, %cst_13 {dimension_numbers = #tpu.dot_dimension_numbers<[1], [0], [0], [1], [0, 0, 1, 1], [], []>} : vector<16x32xf32>, vector<32x32xf32>, vector<16x32xf32> -> vector<16x32xf32>
    %28 = vector.broadcast %9 : vector<1x32xf32> to vector<16x32xf32>
    %29 = arith.addf %27, %28 : vector<16x32xf32>
    %30 = arith.addf %29, %0 : vector<16x32xf32>
    %c480 = arith.constant 480 : index
    %c0_14 = arith.constant 0 : index
    %31 = vector.load %arg1[%c480, %c0_14] : memref<528x128xf32, #tpu.memory_space<vmem>>, vector<1x32xf32>
    %c504 = arith.constant 504 : index
    %c0_15 = arith.constant 0 : index
    %32 = vector.load %arg1[%c504, %c0_15] : memref<528x128xf32, #tpu.memory_space<vmem>>, vector<1x32xf32>
    %cst_16 = arith.constant dense<0.000000e+00> : vector<16xf32>
    %33 = vector.multi_reduction <add>, %30, %cst_16 [1] : vector<16x32xf32> to vector<16xf32>
    %34 = vector.shape_cast %33 : vector<16xf32> to vector<16x1xf32>
    %cst_17 = arith.constant 3.200000e+01 : f32
    %35 = vector.broadcast %cst_17 : f32 to vector<16x1xf32>
    %36 = arith.divf %34, %35 : vector<16x1xf32>
    %37 = vector.broadcast %36 : vector<16x1xf32> to vector<16x32xf32>
    %38 = arith.subf %30, %37 : vector<16x32xf32>
    %39 = vector.broadcast %36 : vector<16x1xf32> to vector<16x32xf32>
    %40 = arith.subf %30, %39 : vector<16x32xf32>
    %41 = arith.mulf %38, %40 : vector<16x32xf32>
    %cst_18 = arith.constant dense<0.000000e+00> : vector<16xf32>
    %42 = vector.multi_reduction <add>, %41, %cst_18 [1] : vector<16x32xf32> to vector<16xf32>
    %43 = vector.shape_cast %42 : vector<16xf32> to vector<16x1xf32>
    %cst_19 = arith.constant 3.200000e+01 : f32
    %44 = vector.broadcast %cst_19 : f32 to vector<16x1xf32>
    %45 = arith.divf %43, %44 : vector<16x1xf32>
    %46 = vector.broadcast %36 : vector<16x1xf32> to vector<16x32xf32>
    %47 = arith.subf %30, %46 : vector<16x32xf32>
    %cst_20 = arith.constant 9.99999974E-6 : f32
    %48 = vector.broadcast %cst_20 : f32 to vector<16x1xf32>
    %49 = arith.addf %45, %48 : vector<16x1xf32>
    %50 = math.rsqrt %49 : vector<16x1xf32>
    %51 = vector.broadcast %50 : vector<16x1xf32> to vector<16x32xf32>
    %52 = arith.mulf %47, %51 : vector<16x32xf32>
    %53 = vector.broadcast %31 : vector<1x32xf32> to vector<16x32xf32>
    %54 = arith.mulf %52, %53 : vector<16x32xf32>
    %55 = vector.broadcast %32 : vector<1x32xf32> to vector<16x32xf32>
    %56 = arith.addf %54, %55 : vector<16x32xf32>
    %c200 = arith.constant 200 : index
    %c0_21 = arith.constant 0 : index
    %57 = vector.load %arg1[%c200, %c0_21] : memref<528x128xf32, #tpu.memory_space<vmem>>, vector<32x32xf32>
    %cst_22 = arith.constant dense<0.000000e+00> : vector<16x32xf32>
    %58 = tpu.matmul %56, %57, %cst_22 {dimension_numbers = #tpu.dot_dimension_numbers<[1], [0], [0], [1], [0, 0, 1, 1], [], []>} : vector<16x32xf32>, vector<32x32xf32>, vector<16x32xf32> -> vector<16x32xf32>
    %c16 = arith.constant 16 : index
    %c0_23 = arith.constant 0 : index
    %59 = vector.load %arg0[%c16, %c0_23] : memref<80x128xf32, #tpu.memory_space<vmem>>, vector<32x32xf32>
    %c232 = arith.constant 232 : index
    %c0_24 = arith.constant 0 : index
    %60 = vector.load %arg1[%c232, %c0_24] : memref<528x128xf32, #tpu.memory_space<vmem>>, vector<32x64xf32>
    %cst_25 = arith.constant dense<0.000000e+00> : vector<32x64xf32>
    %61 = tpu.matmul %59, %60, %cst_25 {dimension_numbers = #tpu.dot_dimension_numbers<[1], [0], [0], [1], [0, 0, 1, 1], [], []>} : vector<32x32xf32>, vector<32x64xf32>, vector<32x64xf32> -> vector<32x64xf32>
    %62 = vector.extract_strided_slice %61 {offsets = [0, 0], sizes = [16, 32], strides = [1, 1]} : vector<32x64xf32> to vector<16x32xf32>
    %63 = vector.extract_strided_slice %61 {offsets = [16, 32], sizes = [16, 32], strides = [1, 1]} : vector<32x64xf32> to vector<16x32xf32>
    %64 = tpu.concatenate %62, %63 in 1 : vector<16x32xf32>, vector<16x32xf32> -> vector<16x64xf32>
    %c64_26 = arith.constant 64 : index
    %c0_27 = arith.constant 0 : index
    %65 = vector.load %arg0[%c64_26, %c0_27] : memref<80x128xf32, #tpu.memory_space<vmem>>, vector<16x64xf32>
    %c264 = arith.constant 264 : index
    %c0_28 = arith.constant 0 : index
    %66 = vector.load %arg1[%c264, %c0_28] : memref<528x128xf32, #tpu.memory_space<vmem>>, vector<32x32xf32>
    %c296 = arith.constant 296 : index
    %c0_29 = arith.constant 0 : index
    %67 = vector.load %arg1[%c296, %c0_29] : memref<528x128xf32, #tpu.memory_space<vmem>>, vector<1x32xf32>
    %68 = tpu.concatenate %64, %64, %64, %64 in 0 : vector<16x64xf32>, vector<16x64xf32>, vector<16x64xf32>, vector<16x64xf32> -> vector<64x64xf32>
    %69 = arith.mulf %68, %2 : vector<64x64xf32>
    %70 = vector.extract_strided_slice %69 {offsets = [0, 0], sizes = [64, 32], strides = [1, 1]} : vector<64x64xf32> to vector<64x32xf32>
    %cst_30 = arith.constant dense<0.000000e+00> : vector<16x64xf32>
    %71 = tpu.matmul %58, %70, %cst_30 {dimension_numbers = #tpu.dot_dimension_numbers<[1], [1], [0], [0], [0, 0, 1, 0], [], []>} : vector<16x32xf32>, vector<64x32xf32>, vector<16x64xf32> -> vector<16x64xf32>
    %72 = arith.addf %71, %65 : vector<16x64xf32>
    %cst_31 = arith.constant dense<0xFF800000> : vector<16xf32>
    %73 = vector.multi_reduction <maximumf>, %72, %cst_31 [1] : vector<16x64xf32> to vector<16xf32>
    %74 = vector.shape_cast %73 : vector<16xf32> to vector<16x1xf32>
    %75 = vector.broadcast %74 : vector<16x1xf32> to vector<16x64xf32>
    %76 = arith.subf %72, %75 : vector<16x64xf32>
    %77 = math.exp %76 : vector<16x64xf32>
    %78 = vector.extract_strided_slice %69 {offsets = [0, 32], sizes = [64, 32], strides = [1, 1]} : vector<64x64xf32> to vector<64x32xf32>
    %cst_32 = arith.constant dense<0.000000e+00> : vector<16x32xf32>
    %79 = tpu.matmul %77, %78, %cst_32 {dimension_numbers = #tpu.dot_dimension_numbers<[1], [0], [0], [1], [0, 0, 1, 1], [], []>} : vector<16x64xf32>, vector<64x32xf32>, vector<16x32xf32> -> vector<16x32xf32>
    %cst_33 = arith.constant dense<0.000000e+00> : vector<16x32xf32>
    %80 = tpu.matmul %77, %1, %cst_33 {dimension_numbers = #tpu.dot_dimension_numbers<[1], [0], [0], [1], [0, 0, 1, 1], [], []>} : vector<16x64xf32>, vector<64x32xf32>, vector<16x32xf32> -> vector<16x32xf32>
    %cst_34 = arith.constant 1.000000e-30 : f32
    %81 = vector.broadcast %cst_34 : f32 to vector<16x32xf32>
    %82 = arith.maximumf %80, %81 : vector<16x32xf32>
    %83 = tpu.reciprocal %82 : vector<16x32xf32> -> vector<16x32xf32>
    %84 = arith.mulf %79, %83 : vector<16x32xf32>
    %cst_35 = arith.constant dense<0.000000e+00> : vector<16x32xf32>
    %85 = tpu.matmul %84, %66, %cst_35 {dimension_numbers = #tpu.dot_dimension_numbers<[1], [0], [0], [1], [0, 0, 1, 1], [], []>} : vector<16x32xf32>, vector<32x32xf32>, vector<16x32xf32> -> vector<16x32xf32>
    %86 = vector.broadcast %67 : vector<1x32xf32> to vector<16x32xf32>
    %87 = arith.addf %85, %86 : vector<16x32xf32>
    %88 = arith.addf %87, %56 : vector<16x32xf32>
    %c488 = arith.constant 488 : index
    %c0_36 = arith.constant 0 : index
    %89 = vector.load %arg1[%c488, %c0_36] : memref<528x128xf32, #tpu.memory_space<vmem>>, vector<1x32xf32>
    %c512 = arith.constant 512 : index
    %c0_37 = arith.constant 0 : index
    %90 = vector.load %arg1[%c512, %c0_37] : memref<528x128xf32, #tpu.memory_space<vmem>>, vector<1x32xf32>
    %cst_38 = arith.constant dense<0.000000e+00> : vector<16xf32>
    %91 = vector.multi_reduction <add>, %88, %cst_38 [1] : vector<16x32xf32> to vector<16xf32>
    %92 = vector.shape_cast %91 : vector<16xf32> to vector<16x1xf32>
    %cst_39 = arith.constant 3.200000e+01 : f32
    %93 = vector.broadcast %cst_39 : f32 to vector<16x1xf32>
    %94 = arith.divf %92, %93 : vector<16x1xf32>
    %95 = vector.broadcast %94 : vector<16x1xf32> to vector<16x32xf32>
    %96 = arith.subf %88, %95 : vector<16x32xf32>
    %97 = vector.broadcast %94 : vector<16x1xf32> to vector<16x32xf32>
    %98 = arith.subf %88, %97 : vector<16x32xf32>
    %99 = arith.mulf %96, %98 : vector<16x32xf32>
    %cst_40 = arith.constant dense<0.000000e+00> : vector<16xf32>
    %100 = vector.multi_reduction <add>, %99, %cst_40 [1] : vector<16x32xf32> to vector<16xf32>
    %101 = vector.shape_cast %100 : vector<16xf32> to vector<16x1xf32>
    %cst_41 = arith.constant 3.200000e+01 : f32
    %102 = vector.broadcast %cst_41 : f32 to vector<16x1xf32>
    %103 = arith.divf %101, %102 : vector<16x1xf32>
    %104 = vector.broadcast %94 : vector<16x1xf32> to vector<16x32xf32>
    %105 = arith.subf %88, %104 : vector<16x32xf32>
    %cst_42 = arith.constant 9.99999974E-6 : f32
    %106 = vector.broadcast %cst_42 : f32 to vector<16x1xf32>
    %107 = arith.addf %103, %106 : vector<16x1xf32>
    %108 = math.rsqrt %107 : vector<16x1xf32>
    %109 = vector.broadcast %108 : vector<16x1xf32> to vector<16x32xf32>
    %110 = arith.mulf %105, %109 : vector<16x32xf32>
    %111 = vector.broadcast %89 : vector<1x32xf32> to vector<16x32xf32>
    %112 = arith.mulf %110, %111 : vector<16x32xf32>
    %113 = vector.broadcast %90 : vector<1x32xf32> to vector<16x32xf32>
    %114 = arith.addf %112, %113 : vector<16x32xf32>
    %c304 = arith.constant 304 : index
    %c0_43 = arith.constant 0 : index
    %115 = vector.load %arg1[%c304, %c0_43] : memref<528x128xf32, #tpu.memory_space<vmem>>, vector<32x128xf32>
    %cst_44 = arith.constant dense<0.000000e+00> : vector<16x128xf32>
    %116 = tpu.matmul %114, %115, %cst_44 {dimension_numbers = #tpu.dot_dimension_numbers<[1], [0], [0], [1], [0, 0, 1, 1], [], []>} : vector<16x32xf32>, vector<32x128xf32>, vector<16x128xf32> -> vector<16x128xf32>
    %c336 = arith.constant 336 : index
    %c0_45 = arith.constant 0 : index
    %117 = vector.load %arg1[%c336, %c0_45] : memref<528x128xf32, #tpu.memory_space<vmem>>, vector<1x128xf32>
    %118 = vector.broadcast %117 : vector<1x128xf32> to vector<16x128xf32>
    %119 = arith.addf %116, %118 : vector<16x128xf32>
    %cst_46 = arith.constant 0.000000e+00 : f32
    %120 = vector.broadcast %cst_46 : f32 to vector<16x128xf32>
    %121 = arith.maximumf %119, %120 : vector<16x128xf32>
    %c344 = arith.constant 344 : index
    %c0_47 = arith.constant 0 : index
    %122 = vector.load %arg1[%c344, %c0_47] : memref<528x128xf32, #tpu.memory_space<vmem>>, vector<128x32xf32>
    %cst_48 = arith.constant dense<0.000000e+00> : vector<16x32xf32>
    %123 = tpu.matmul %121, %122, %cst_48 {dimension_numbers = #tpu.dot_dimension_numbers<[1], [0], [0], [1], [0, 0, 1, 1], [], []>} : vector<16x128xf32>, vector<128x32xf32>, vector<16x32xf32> -> vector<16x32xf32>
    %c472 = arith.constant 472 : index
    %c0_49 = arith.constant 0 : index
    %124 = vector.load %arg1[%c472, %c0_49] : memref<528x128xf32, #tpu.memory_space<vmem>>, vector<1x32xf32>
    %125 = vector.broadcast %124 : vector<1x32xf32> to vector<16x32xf32>
    %126 = arith.addf %123, %125 : vector<16x32xf32>
    %127 = arith.addf %126, %114 : vector<16x32xf32>
    %c496 = arith.constant 496 : index
    %c0_50 = arith.constant 0 : index
    %128 = vector.load %arg1[%c496, %c0_50] : memref<528x128xf32, #tpu.memory_space<vmem>>, vector<1x32xf32>
    %c520 = arith.constant 520 : index
    %c0_51 = arith.constant 0 : index
    %129 = vector.load %arg1[%c520, %c0_51] : memref<528x128xf32, #tpu.memory_space<vmem>>, vector<1x32xf32>
    %cst_52 = arith.constant dense<0.000000e+00> : vector<16xf32>
    %130 = vector.multi_reduction <add>, %127, %cst_52 [1] : vector<16x32xf32> to vector<16xf32>
    %131 = vector.shape_cast %130 : vector<16xf32> to vector<16x1xf32>
    %cst_53 = arith.constant 3.200000e+01 : f32
    %132 = vector.broadcast %cst_53 : f32 to vector<16x1xf32>
    %133 = arith.divf %131, %132 : vector<16x1xf32>
    %134 = vector.broadcast %133 : vector<16x1xf32> to vector<16x32xf32>
    %135 = arith.subf %127, %134 : vector<16x32xf32>
    %136 = vector.broadcast %133 : vector<16x1xf32> to vector<16x32xf32>
    %137 = arith.subf %127, %136 : vector<16x32xf32>
    %138 = arith.mulf %135, %137 : vector<16x32xf32>
    %cst_54 = arith.constant dense<0.000000e+00> : vector<16xf32>
    %139 = vector.multi_reduction <add>, %138, %cst_54 [1] : vector<16x32xf32> to vector<16xf32>
    %140 = vector.shape_cast %139 : vector<16xf32> to vector<16x1xf32>
    %cst_55 = arith.constant 3.200000e+01 : f32
    %141 = vector.broadcast %cst_55 : f32 to vector<16x1xf32>
    %142 = arith.divf %140, %141 : vector<16x1xf32>
    %143 = vector.broadcast %133 : vector<16x1xf32> to vector<16x32xf32>
    %144 = arith.subf %127, %143 : vector<16x32xf32>
    %cst_56 = arith.constant 9.99999974E-6 : f32
    %145 = vector.broadcast %cst_56 : f32 to vector<16x1xf32>
    %146 = arith.addf %142, %145 : vector<16x1xf32>
    %147 = math.rsqrt %146 : vector<16x1xf32>
    %148 = vector.broadcast %147 : vector<16x1xf32> to vector<16x32xf32>
    %149 = arith.mulf %144, %148 : vector<16x32xf32>
    %150 = vector.broadcast %128 : vector<1x32xf32> to vector<16x32xf32>
    %151 = arith.mulf %149, %150 : vector<16x32xf32>
    %152 = vector.broadcast %129 : vector<1x32xf32> to vector<16x32xf32>
    %153 = arith.addf %151, %152 : vector<16x32xf32>
    %c0_57 = arith.constant 0 : index
    %c0_58 = arith.constant 0 : index
    %154 = vector.load %arg2[%c0_57, %c0_58] : memref<16x32xf32, #tpu.memory_space<vmem>>, vector<16x32xf32>
    tpu.vector_store %arg2[%c0_57, %c0_58], %153 {strides = array<i32>} : memref<16x32xf32, #tpu.memory_space<vmem>>, vector<16x32xf32>,
    return
  }
}

</mosaic_0001>

<llo_original>
// kernel: decoder_block.1
$region0: #{decoder_block.1}
  #allocation0 [shape = 'u32[]', space=smem, size = 0x4, offset = 0x4, fixed_abs, tag = 'smem constant byte address 0x4 - core index']
  #allocation1 [shape = 'u32[144,128]{1,0:T(1,128)}', space=vmem, size = 0x12000, scoped, tag = 'internal scratch']
  %s0 = inlined_call_operand.vmem [shape: f32[80,128], index: 0, kind: input, shape index: {}]
  %s1 = inlined_call_operand.vmem [shape: f32[528,128], index: 1, kind: input, shape index: {}]
  %s2 = inlined_call_operand.hbm [shape: f32[16,32], index: 2, kind: output, shape index: {}]
  %s3 = sld [smem:[#allocation0]]
  $region18: #{decoder_block.1} parent=0
    _
  %s5 = ssub.s32 1, %s3
  %s6 = scalar_select 0, %s5, %s3
  $region1: #{decoder_block.1} parent=0
    #allocation2 [shape = 'u8[8192]{0}', space=vmem, size = 0x2000, scoped, tag = 'output window, operand 0, single buffered']
    #allocation3 [shape = 's32[1]{0}', space=sflag, size = 0x4, scoped, tag = 'scoped memory for decoder_block.1']
    %7 = vsyncpa [#allocation3], 0
    // Predicated region
    $region2: #{decoder_block.1} parent=1 // pred_check
      _
    $region3: #{decoder_block.1} parent=1 // pred_check_branch
      %9 = sbr.rel (0) target = $region5
    $region4: #{decoder_block.1} parent=1 // pred_region
      _
    $region5: #{decoder_block.1} parent=1 // pred_fallthru
      _
    // Predicated region
    $region6: #{decoder_block.1} parent=1 // pred_check
      _
    $region7: #{decoder_block.1} parent=1 // pred_check_branch
      %11 = sbr.rel (0) target = $region9
    $region8: #{decoder_block.1} parent=1 // pred_region
      _
    $region9: #{decoder_block.1} parent=1 // pred_fallthru
      _
    %v12 = vld [vmem:[%s0] sm:$0xff]
    %v13 = vld [vmem:[%s0 + $0x8] sm:$0xff]
    %v14 = vld [vmem:[%s1] sm:$0xff]
    %v15 = vld [vmem:[%s1 + $0x8] sm:$0xff]
    %v16 = vld [vmem:[%s1 + $0x10] sm:$0xff]
    %v17 = vld [vmem:[%s1 + $0x18] sm:$0xff]
    %v18 = vld [vmem:[%s1 + $0x20] sm:$0xff]
    %v19 = vld [vmem:[%s1 + $0x28] sm:$0xff]
    %v20 = vld [vmem:[%s1 + $0x30] sm:$0xff]
    %v21 = vld [vmem:[%s1 + $0x38] sm:$0xff]
    %v22 = vld [vmem:[%s1 + $0x40] sm:$0xff]
    %v23 = vld [vmem:[%s1 + $0x48] sm:$0xff]
    %v24 = vld [vmem:[%s1 + $0x50] sm:$0xff]
    %v25 = vld [vmem:[%s1 + $0x58] sm:$0xff]
    %v26 = vld [vmem:[%s1 + $0x60] sm:$0xff]
    %v27 = vld [vmem:[%s1 + $0x68] sm:$0xff]
    %v28 = vld [vmem:[%s1 + $0x70] sm:$0xff]
    %v29 = vld [vmem:[%s1 + $0x78] sm:$0xff]
    %v30 = vld [vmem:[%s1 + $0x80] sm:$0xff]
    %v31 = vld [vmem:[%s1 + $0x88] sm:$0xff]
    %v32 = vld [vmem:[%s1 + $0x90] sm:$0xff]
    %v33 = vld [vmem:[%s1 + $0x98] sm:$0xff]
    %vm34 = vcmask 261120
    %v36 = vsel %vm34, %v12, 0
    %v39 = vsel %vm34, %v13, 0
    %41 = vmatprep.subr.mxu0 0.0
    %42 = vmatpush1.msra.mxu0 0.0
    %43 = vmatprep.subr.mxu0 0.0
    %44 = vmatpush1.msra.mxu0 0.0
    %45 = vmatprep.subr.mxu0 0.0
    %46 = vmatpush1.msra.mxu0 0.0
    %47 = vmatprep.subr.mxu0 0.0
    %48 = vmatpush1.msra.mxu0 0.0
    %49 = vmatprep.subr.mxu0 0.0
    %50 = vmatpush1.msra.mxu0 0.0
    %51 = vmatprep.subr.mxu0 0.0
    %52 = vmatpush1.msra.mxu0 0.0
    %53 = vmatprep.subr.mxu0 0.0
    %54 = vmatpush1.msra.mxu0 0.0
    %55 = vmatprep.subr.mxu0 0.0
    %56 = vmatpush1.msra.mxu0 0.0
    %57 = vmatprep.subr.mxu0 0.0
    %58 = vmatpush1.msra.mxu0 0.0
    %59 = vmatprep.subr.mxu0 0.0
    %60 = vmatpush1.msra.mxu0 0.0
    %61 = vmatprep.subr.mxu0 0.0
    %62 = vmatpush1.msra.mxu0 0.0
    %63 = vmatprep.subr.mxu0 0.0
    %64 = vmatpush1.msra.mxu0 0.0
    %65 = vmatprep.subr.mxu0 0.0
    %66 = vmatpush1.msra.mxu0 %v33
    %67 = vmatprep.subr.mxu0 0.0
    %68 = vmatpush1.msra.mxu0 %v32
    %69 = vmatprep.subr.mxu0 0.0
    %70 = vmatpush1.msra.mxu0 %v31
    %71 = vmatprep.subr.mxu0 0.0
    %72 = vmatpush1.msra.mxu0 %v30
    %73 = vmatprep.subr.mxu0 0.0
    %74 = vmatpush2.msra.mxu0 0.0
    %75 = vmatprep.subr.mxu0 0.0
    %76 = vmatpush2.msra.mxu0 0.0
    %77 = vmatprep.subr.mxu0 0.0
    %78 = vmatpush2.msra.mxu0 0.0
    %79 = vmatprep.subr.mxu0 0.0
    %80 = vmatpush2.msra.mxu0 0.0
    %81 = vmatprep.subr.mxu0 0.0
    %82 = vmatpush2.msra.mxu0 0.0
    %83 = vmatprep.subr.mxu0 0.0
    %84 = vmatpush2.msra.mxu0 0.0
    %85 = vmatprep.subr.mxu0 0.0
    %86 = vmatpush2.msra.mxu0 0.0
    %87 = vmatprep.subr.mxu0 0.0
    %88 = vmatpush2.msra.mxu0 0.0
    %89 = vmatprep.subr.mxu0 0.0
    %90 = vmatpush2.msra.mxu0 0.0
    %91 = vmatprep.subr.mxu0 0.0
    %92 = vmatpush2.msra.mxu0 0.0
    %93 = vmatprep.subr.mxu0 0.0
    %94 = vmatpush2.msra.mxu0 0.0
    %95 = vmatprep.subr.mxu0 0.0
    %96 = vmatpush2.msra.mxu0 0.0
    %97 = vmatprep.subr.mxu0 0.0
    %98 = vmatpush2.msra.mxu0 0.0
    %99 = vmatprep.subr.mxu0 0.0
    %100 = vmatpush2.msra.mxu0 0.0
    %101 = vmatprep.subr.mxu0 0.0
    %102 = vmatpush2.msra.mxu0 0.0
    %103 = vmatprep.subr.mxu0 0.0
    %104 = vmatpush2.msra.mxu0 0.0
    %105 = vmatprep.mubr.f32.mxu0 0.0
    %106 = vmatmul.mubr.f32.gmra.mxu0 %v36
    %v107 = vpop.f32.mrf.mxu0
    %v108 = vadd.f32 0.0, %v107
    %v109 = vpop.f32.mrf.mxu0
    %110 = vmatprep.mubr.f32.mxu0 0.0
    %111 = vmatmul.mubr.f32.gmra.mxu0 %v39
    %v112 = vpop.f32.mrf.mxu0
    %v113 = vadd.f32 0.0, %v112
    %v114 = vpop.f32.mrf.mxu0
    %115 = vdwg.mxu0
    %v116 = vld [vmem:[%s0 + $0x30] sm:$0xff]
    %v117 = vld [vmem:[%s0 + $0x38] sm:$0xff]
    %v118 = vld [vmem:[%s1 + $0xa0] sm:$0xff]
    %v119 = vld [vmem:[%s1 + $0xa8] sm:$0xff]
    %v120 = vld [vmem:[%s1 + $0xb0] sm:$0xff]
    %v121 = vld [vmem:[%s1 + $0xb8] sm:$0xff]
    %v122 = vld [vmem:[%s1 + $0xc0] sm:$0x1]
    %131 = vrot.lane.b32.xlu0 %v22, 32
    %v132 = vpop.permute.xlu0 %131
    %133 = vrot.lane.b32.xlu0 %v23, 32
    %v134 = vpop.permute.xlu0 %133
    %135 = vrot.lane.b32.xlu0 %v24, 32
    %v136 = vpop.permute.xlu0 %135
    %137 = vrot.lane.b32.xlu0 %v25, 32
    %v138 = vpop.permute.xlu0 %137
    %139 = vrot.lane.b32.xlu0 %v26, 32
    %v140 = vpop.permute.xlu0 %139
    %141 = vrot.lane.b32.xlu0 %v27, 32
    %v142 = vpop.permute.xlu0 %141
    %143 = vrot.lane.b32.xlu0 %v28, 32
    %v144 = vpop.permute.xlu0 %143
    %145 = vrot.lane.b32.xlu0 %v29, 32
    %v146 = vpop.permute.xlu0 %145
    %v155 = vmul.f32 %v108, %v132
    %v156 = vmul.f32 %v113, %v134
    %v157 = vmul.f32 %v108, %v136
    %v158 = vmul.f32 %v113, %v138
    %v159 = vmul.f32 %v108, %v140
    %v160 = vmul.f32 %v113, %v142
    %v161 = vmul.f32 %v108, %v144
    %v162 = vmul.f32 %v113, %v146
    %171 = vrot.lane.b32.xlu0 %v155, 96
    %v172 = vpop.permute.xlu0 %171
    %173 = vrot.lane.b32.xlu0 %v156, 96
    %v174 = vpop.permute.xlu0 %173
    %175 = vrot.lane.b32.xlu0 %v157, 96
    %v176 = vpop.permute.xlu0 %175
    %177 = vrot.lane.b32.xlu0 %v158, 96
    %v178 = vpop.permute.xlu0 %177
    %179 = vrot.lane.b32.xlu0 %v159, 96
    %v180 = vpop.permute.xlu0 %179
    %181 = vrot.lane.b32.xlu0 %v160, 96
    %v182 = vpop.permute.xlu0 %181
    %183 = vrot.lane.b32.xlu0 %v161, 96
    %v184 = vpop.permute.xlu0 %183
    %185 = vrot.lane.b32.xlu0 %v162, 96
    %v186 = vpop.permute.xlu0 %185
    %v188 = vsel %vm34, %v108, 0
    %v191 = vsel %vm34, %v113, 0
    %v193 = vsel %vm34, %v172, 0
    %v195 = vsel %vm34, %v174, 0
    %v197 = vsel %vm34, %v176, 0
    %v199 = vsel %vm34, %v178, 0
    %v201 = vsel %vm34, %v180, 0
    %v203 = vsel %vm34, %v182, 0
    %v205 = vsel %vm34, %v184, 0
    %v207 = vsel %vm34, %v186, 0
    %209 = vmatprep.subr.mxu0 0.0
    %210 = vmatpush1.xpose.msra.mxu0 0.0
    %211 = vmatprep.subr.mxu0 0.0
    %212 = vmatpush1.xpose.msra.mxu0 0.0
    %213 = vmatprep.subr.mxu0 0.0
    %214 = vmatpush1.xpose.msra.mxu0 0.0
    %215 = vmatprep.subr.mxu0 0.0
    %216 = vmatpush1.xpose.msra.mxu0 0.0
    %217 = vmatprep.subr.mxu0 0.0
    %218 = vmatpush1.xpose.msra.mxu0 0.0
    %219 = vmatprep.subr.mxu0 0.0
    %220 = vmatpush1.xpose.msra.mxu0 0.0
    %221 = vmatprep.subr.mxu0 0.0
    %222 = vmatpush1.xpose.msra.mxu0 0.0
    %223 = vmatprep.subr.mxu0 0.0
    %224 = vmatpush1.xpose.msra.mxu0 0.0
    %225 = vmatprep.subr.mxu0 0.0
    %226 = vmatpush1.xpose.msra.mxu0 %v207
    %227 = vmatprep.subr.mxu0 0.0
    %228 = vmatpush1.xpose.msra.mxu0 %v205
    %229 = vmatprep.subr.mxu0 0.0
    %230 = vmatpush1.xpose.msra.mxu0 %v203
    %231 = vmatprep.subr.mxu0 0.0
    %232 = vmatpush1.xpose.msra.mxu0 %v201
    %233 = vmatprep.subr.mxu0 0.0
    %234 = vmatpush1.xpose.msra.mxu0 %v199
    %235 = vmatprep.subr.mxu0 0.0
    %236 = vmatpush1.xpose.msra.mxu0 %v197
    %237 = vmatprep.subr.mxu0 0.0
    %238 = vmatpush1.xpose.msra.mxu0 %v195
    %239 = vmatprep.subr.mxu0 0.0
    %240 = vmatpush1.xpose.msra.mxu0 %v193
    %241 = vmatprep.subr.mxu0 0.0
    %242 = vmatpush2.xpose.msra.mxu0 0.0
    %243 = vmatprep.subr.mxu0 0.0
    %244 = vmatpush2.xpose.msra.mxu0 0.0
    %245 = vmatprep.subr.mxu0 0.0
    %246 = vmatpush2.xpose.msra.mxu0 0.0
    %247 = vmatprep.subr.mxu0 0.0
    %248 = vmatpush2.xpose.msra.mxu0 0.0
    %249 = vmatprep.subr.mxu0 0.0
    %250 = vmatpush2.xpose.msra.mxu0 0.0
    %251 = vmatprep.subr.mxu0 0.0
    %252 = vmatpush2.xpose.msra.mxu0 0.0
    %253 = vmatprep.subr.mxu0 0.0
    %254 = vmatpush2.xpose.msra.mxu0 0.0
    %255 = vmatprep.subr.mxu0 0.0
    %256 = vmatpush2.xpose.msra.mxu0 0.0
    %257 = vmatprep.subr.mxu0 0.0
    %258 = vmatpush2.xpose.msra.mxu0 0.0
    %259 = vmatprep.subr.mxu0 0.0
    %260 = vmatpush2.xpose.msra.mxu0 0.0
    %261 = vmatprep.subr.mxu0 0.0
    %262 = vmatpush2.xpose.msra.mxu0 0.0
    %263 = vmatprep.subr.mxu0 0.0
    %264 = vmatpush2.xpose.msra.mxu0 0.0
    %265 = vmatprep.subr.mxu0 0.0
    %266 = vmatpush2.xpose.msra.mxu0 0.0
    %267 = vmatprep.subr.mxu0 0.0
    %268 = vmatpush2.xpose.msra.mxu0 0.0
    %269 = vmatprep.subr.mxu0 0.0
    %270 = vmatpush2.xpose.msra.mxu0 0.0
    %271 = vmatprep.subr.mxu0 0.0
    %272 = vmatpush2.xpose.msra.mxu0 0.0
    %273 = vmatprep.mubr.f32.mxu0 0.0
    %274 = vmatmul.mubr.f32.gmra.mxu0 %v188
    %v275 = vpop.f32.mrf.mxu0
    %v276 = vadd.f32 %v116, %v275
    %v277 = vpop.f32.mrf.mxu0
    %278 = vmatprep.mubr.f32.mxu0 0.0
    %279 = vmatmul.mubr.f32.gmra.mxu0 %v191
    %v280 = vpop.f32.mrf.mxu0
    %v281 = vadd.f32 %v117, %v280
    %v282 = vpop.f32.mrf.mxu0
    %283 = vdwg.mxu0
    %vm284 = vcmask 523264
    %v285 = vsel %vm284, %v276, -inf
    %286 = vmax.xlane.f32.xlu0 %v285
    %v287 = vpop.xlane.xlu0 %286
    %v288 = vsel %vm284, %v281, -inf
    %289 = vmax.xlane.f32.xlu0 %v288
    %v290 = vpop.xlane.xlu0 %289
    %v291 = vsub.f32 %v276, %v287
    %v292 = vsub.f32 %v281, %v290
    %v293 = vmul.f32 %v291, 1.442695
    %v294 = vpow.pop %v293
    %v295 = vmul.f32 %v292, 1.442695
    %v296 = vpow.pop %v295
    %297 = vrot.lane.b32.xlu0 %v155, 64
    %v298 = vpop.permute.xlu0 %297
    %299 = vrot.lane.b32.xlu0 %v156, 64
    %v300 = vpop.permute.xlu0 %299
    %301 = vrot.lane.b32.xlu0 %v157, 64
    %v302 = vpop.permute.xlu0 %301
    %303 = vrot.lane.b32.xlu0 %v158, 64
    %v304 = vpop.permute.xlu0 %303
    %305 = vrot.lane.b32.xlu0 %v159, 64
    %v306 = vpop.permute.xlu0 %305
    %307 = vrot.lane.b32.xlu0 %v160, 64
    %v308 = vpop.permute.xlu0 %307
    %309 = vrot.lane.b32.xlu0 %v161, 64
    %v310 = vpop.permute.xlu0 %309
    %311 = vrot.lane.b32.xlu0 %v162, 64
    %v312 = vpop.permute.xlu0 %311
    %v322 = vsel %vm284, %v294, 0
    %v325 = vsel %vm284, %v296, 0
    %327 = vmatprep.subr.mxu0 0.0
    %328 = vmatpush1.msra.mxu0 0.0
    %329 = vmatprep.subr.mxu0 0.0
    %330 = vmatpush1.msra.mxu0 0.0
    %331 = vmatprep.subr.mxu0 0.0
    %332 = vmatpush1.msra.mxu0 0.0
    %333 = vmatprep.subr.mxu0 0.0
    %334 = vmatpush1.msra.mxu0 0.0
    %335 = vmatprep.subr.mxu0 0.0
    %336 = vmatpush1.msra.mxu0 0.0
    %337 = vmatprep.subr.mxu0 0.0
    %338 = vmatpush1.msra.mxu0 0.0
    %339 = vmatprep.subr.mxu0 0.0
    %340 = vmatpush1.msra.mxu0 0.0
    %341 = vmatprep.subr.mxu0 0.0
    %342 = vmatpush1.msra.mxu0 0.0
    %343 = vmatprep.subr.mxu0 0.0
    %344 = vmatpush1.msra.mxu0 %v312
    %345 = vmatprep.subr.mxu0 0.0
    %346 = vmatpush1.msra.mxu0 %v310
    %347 = vmatprep.subr.mxu0 0.0
    %348 = vmatpush1.msra.mxu0 %v308
    %349 = vmatprep.subr.mxu0 0.0
    %350 = vmatpush1.msra.mxu0 %v306
    %351 = vmatprep.subr.mxu0 0.0
    %352 = vmatpush1.msra.mxu0 %v304
    %353 = vmatprep.subr.mxu0 0.0
    %354 = vmatpush1.msra.mxu0 %v302
    %355 = vmatprep.subr.mxu0 0.0
    %356 = vmatpush1.msra.mxu0 %v300
    %357 = vmatprep.subr.mxu0 0.0
    %358 = vmatpush1.msra.mxu0 %v298
    %359 = vmatprep.subr.mxu0 0.0
    %360 = vmatpush2.msra.mxu0 0.0
    %361 = vmatprep.subr.mxu0 0.0
    %362 = vmatpush2.msra.mxu0 0.0
    %363 = vmatprep.subr.mxu0 0.0
    %364 = vmatpush2.msra.mxu0 0.0
    %365 = vmatprep.subr.mxu0 0.0
    %366 = vmatpush2.msra.mxu0 0.0
    %367 = vmatprep.subr.mxu0 0.0
    %368 = vmatpush2.msra.mxu0 0.0
    %369 = vmatprep.subr.mxu0 0.0
    %370 = vmatpush2.msra.mxu0 0.0
    %371 = vmatprep.subr.mxu0 0.0
    %372 = vmatpush2.msra.mxu0 0.0
    %373 = vmatprep.subr.mxu0 0.0
    %374 = vmatpush2.msra.mxu0 0.0
    %375 = vmatprep.subr.mxu0 0.0
    %376 = vmatpush2.msra.mxu0 0.0
    %377 = vmatprep.subr.mxu0 0.0
    %378 = vmatpush2.msra.mxu0 0.0
    %379 = vmatprep.subr.mxu0 0.0
    %380 = vmatpush2.msra.mxu0 0.0
    %381 = vmatprep.subr.mxu0 0.0
    %382 = vmatpush2.msra.mxu0 0.0
    %383 = vmatprep.subr.mxu0 0.0
    %384 = vmatpush2.msra.mxu0 0.0
    %385 = vmatprep.subr.mxu0 0.0
    %386 = vmatpush2.msra.mxu0 0.0
    %387 = vmatprep.subr.mxu0 0.0
    %388 = vmatpush2.msra.mxu0 0.0
    %389 = vmatprep.subr.mxu0 0.0
    %390 = vmatpush2.msra.mxu0 0.0
    %391 = vmatprep.mubr.f32.mxu0 0.0
    %392 = vmatmul.mubr.f32.gmra.mxu0 %v322
    %v393 = vpop.f32.mrf.mxu0
    %v394 = vadd.f32 0.0, %v393
    %v395 = vpop.f32.mrf.mxu0
    %396 = vmatprep.mubr.f32.mxu0 0.0
    %397 = vmatmul.mubr.f32.gmra.mxu0 %v325
    %v398 = vpop.f32.mrf.mxu0
    %v399 = vadd.f32 0.0, %v398
    %v400 = vpop.f32.mrf.mxu0
    %401 = vdwg.mxu0
    %402 = vmatprep.subr.mxu0 0.0
    %403 = vmatpush1.msra.mxu0 0.0
    %404 = vmatprep.subr.mxu0 0.0
    %405 = vmatpush1.msra.mxu0 0.0
    %406 = vmatprep.subr.mxu0 0.0
    %407 = vmatpush1.msra.mxu0 0.0
    %408 = vmatprep.subr.mxu0 0.0
    %409 = vmatpush1.msra.mxu0 0.0
    %410 = vmatprep.subr.mxu0 0.0
    %411 = vmatpush1.msra.mxu0 0.0
    %412 = vmatprep.subr.mxu0 0.0
    %413 = vmatpush1.msra.mxu0 0.0
    %414 = vmatprep.subr.mxu0 0.0
    %415 = vmatpush1.msra.mxu0 0.0
    %416 = vmatprep.subr.mxu0 0.0
    %417 = vmatpush1.msra.mxu0 0.0
    %418 = vmatprep.subr.mxu0 0.0
    %419 = vmatpush1.msra.mxu0 %v21
    %420 = vmatprep.subr.mxu0 0.0
    %421 = vmatpush1.msra.mxu0 %v20
    %422 = vmatprep.subr.mxu0 0.0
    %423 = vmatpush1.msra.mxu0 %v19
    %424 = vmatprep.subr.mxu0 0.0
    %425 = vmatpush1.msra.mxu0 %v18
    %426 = vmatprep.subr.mxu0 0.0
    %427 = vmatpush1.msra.mxu0 %v17
    %428 = vmatprep.subr.mxu0 0.0
    %429 = vmatpush1.msra.mxu0 %v16
    %430 = vmatprep.subr.mxu0 0.0
    %431 = vmatpush1.msra.mxu0 %v15
    %432 = vmatprep.subr.mxu0 0.0
    %433 = vmatpush1.msra.mxu0 %v14
    %434 = vmatprep.subr.mxu0 0.0
    %435 = vmatpush2.msra.mxu0 0.0
    %436 = vmatprep.subr.mxu0 0.0
    %437 = vmatpush2.msra.mxu0 0.0
    %438 = vmatprep.subr.mxu0 0.0
    %439 = vmatpush2.msra.mxu0 0.0
    %440 = vmatprep.subr.mxu0 0.0
    %441 = vmatpush2.msra.mxu0 0.0
    %442 = vmatprep.subr.mxu0 0.0
    %443 = vmatpush2.msra.mxu0 0.0
    %444 = vmatprep.subr.mxu0 0.0
    %445 = vmatpush2.msra.mxu0 0.0
    %446 = vmatprep.subr.mxu0 0.0
    %447 = vmatpush2.msra.mxu0 0.0
    %448 = vmatprep.subr.mxu0 0.0
    %449 = vmatpush2.msra.mxu0 0.0
    %450 = vmatprep.subr.mxu0 0.0
    %451 = vmatpush2.msra.mxu0 0.0
    %452 = vmatprep.subr.mxu0 0.0
    %453 = vmatpush2.msra.mxu0 0.0
    %454 = vmatprep.subr.mxu0 0.0
    %455 = vmatpush2.msra.mxu0 0.0
    %456 = vmatprep.subr.mxu0 0.0
    %457 = vmatpush2.msra.mxu0 0.0
    %458 = vmatprep.subr.mxu0 0.0
    %459 = vmatpush2.msra.mxu0 0.0
    %460 = vmatprep.subr.mxu0 0.0
    %461 = vmatpush2.msra.mxu0 0.0
    %462 = vmatprep.subr.mxu0 0.0
    %463 = vmatpush2.msra.mxu0 0.0
    %464 = vmatprep.subr.mxu0 0.0
    %465 = vmatpush2.msra.mxu0 0.0
    %466 = vmatprep.mubr.f32.mxu0 0.0
    %467 = vmatmul.mubr.f32.gmra.mxu0 %v322
    %v468 = vpop.f32.mrf.mxu0
    %v469 = vadd.f32 0.0, %v468
    %v470 = vpop.f32.mrf.mxu0
    %471 = vmatprep.mubr.f32.mxu0 0.0
    %472 = vmatmul.mubr.f32.gmra.mxu0 %v325
    %v473 = vpop.f32.mrf.mxu0
    %v474 = vadd.f32 0.0, %v473
    %v475 = vpop.f32.mrf.mxu0
    %476 = vdwg.mxu0
    %v477 = vmax.f32 %v469, 1e-30
    %v478 = vmax.f32 %v474, 1e-30
    %v479 = vrcp.pop %v477
    %v480 = vrcp.pop %v478
    %v481 = vmul.f32 %v394, %v479
    %v482 = vmul.f32 %v399, %v480
    %v483 = vlaneseq
    %v484 = vshrl.u32 %v483, 7
    %v485 = vsub.s32 0, %v484
    %v486 = vrot.slane %v122, %v485
    %v488 = vsel %vm34, %v481, 0
    %v491 = vsel %vm34, %v482, 0
    %493 = vmatprep.subr.mxu0 0.0
    %494 = vmatpush1.msra.mxu0 0.0
    %495 = vmatprep.subr.mxu0 0.0
    %496 = vmatpush1.msra.mxu0 0.0
    %497 = vmatprep.subr.mxu0 0.0
    %498 = vmatpush1.msra.mxu0 0.0
    %499 = vmatprep.subr.mxu0 0.0
    %500 = vmatpush1.msra.mxu0 0.0
    %501 = vmatprep.subr.mxu0 0.0
    %502 = vmatpush1.msra.mxu0 0.0
    %503 = vmatprep.subr.mxu0 0.0
    %504 = vmatpush1.msra.mxu0 0.0
    %505 = vmatprep.subr.mxu0 0.0
    %506 = vmatpush1.msra.mxu0 0.0
    %507 = vmatprep.subr.mxu0 0.0
    %508 = vmatpush1.msra.mxu0 0.0
    %509 = vmatprep.subr.mxu0 0.0
    %510 = vmatpush1.msra.mxu0 0.0
    %511 = vmatprep.subr.mxu0 0.0
    %512 = vmatpush1.msra.mxu0 0.0
    %513 = vmatprep.subr.mxu0 0.0
    %514 = vmatpush1.msra.mxu0 0.0
    %515 = vmatprep.subr.mxu0 0.0
    %516 = vmatpush1.msra.mxu0 0.0
    %517 = vmatprep.subr.mxu0 0.0
    %518 = vmatpush1.msra.mxu0 %v121
    %519 = vmatprep.subr.mxu0 0.0
    %520 = vmatpush1.msra.mxu0 %v120
    %521 = vmatprep.subr.mxu0 0.0
    %522 = vmatpush1.msra.mxu0 %v119
    %523 = vmatprep.subr.mxu0 0.0
    %524 = vmatpush1.msra.mxu0 %v118
    %525 = vmatprep.subr.mxu0 0.0
    %526 = vmatpush2.msra.mxu0 0.0
    %527 = vmatprep.subr.mxu0 0.0
    %528 = vmatpush2.msra.mxu0 0.0
    %529 = vmatprep.subr.mxu0 0.0
    %530 = vmatpush2.msra.mxu0 0.0
    %531 = vmatprep.subr.mxu0 0.0
    %532 = vmatpush2.msra.mxu0 0.0
    %533 = vmatprep.subr.mxu0 0.0
    %534 = vmatpush2.msra.mxu0 0.0
    %535 = vmatprep.subr.mxu0 0.0
    %536 = vmatpush2.msra.mxu0 0.0
    %537 = vmatprep.subr.mxu0 0.0
    %538 = vmatpush2.msra.mxu0 0.0
    %539 = vmatprep.subr.mxu0 0.0
    %540 = vmatpush2.msra.mxu0 0.0
    %541 = vmatprep.subr.mxu0 0.0
    %542 = vmatpush2.msra.mxu0 0.0
    %543 = vmatprep.subr.mxu0 0.0
    %544 = vmatpush2.msra.mxu0 0.0
    %545 = vmatprep.subr.mxu0 0.0
    %546 = vmatpush2.msra.mxu0 0.0
    %547 = vmatprep.subr.mxu0 0.0
    %548 = vmatpush2.msra.mxu0 0.0
    %549 = vmatprep.subr.mxu0 0.0
    %550 = vmatpush2.msra.mxu0 0.0
    %551 = vmatprep.subr.mxu0 0.0
    %552 = vmatpush2.msra.mxu0 0.0
    %553 = vmatprep.subr.mxu0 0.0
    %554 = vmatpush2.msra.mxu0 0.0
    %555 = vmatprep.subr.mxu0 0.0
    %556 = vmatpush2.msra.mxu0 0.0
    %557 = vmatprep.mubr.f32.mxu0 0.0
    %558 = vmatmul.mubr.f32.gmra.mxu0 %v488
    %v559 = vpop.f32.mrf.mxu0
    %v560 = vadd.f32 %v486, %v559
    %v561 = vpop.f32.mrf.mxu0
    %562 = vmatprep.mubr.f32.mxu0 0.0
    %563 = vmatmul.mubr.f32.gmra.mxu0 %v491
    %v564 = vpop.f32.mrf.mxu0
    %v565 = vadd.f32 %v486, %v564
    %v566 = vpop.f32.mrf.mxu0
    %567 = vdwg.mxu0
    %v568 = vadd.f32 %v560, %v12
    %v569 = vadd.f32 %v565, %v13
    %v570 = vld [vmem:[%s1 + $0x1e0] sm:$0x1]
    %v571 = vld [vmem:[%s1 + $0x1f8] sm:$0x1]
    %v572 = vsel %vm34, %v568, 0.0
    %573 = vadd.xlane.f32.xlu0 %v572
    %v574 = vpop.xlane.xlu0 %573
    %v575 = vsel %vm34, %v569, 0.0
    %576 = vadd.xlane.f32.xlu0 %v575
    %v577 = vpop.xlane.xlu0 %576
    %v578 = vrcp.pop 32.0
    %v579 = vmul.f32 %v574, %v578
    %v580 = vmul.f32 %v577, %v578
    %v581 = vsub.f32 %v568, %v579
    %v582 = vsub.f32 %v569, %v580
    %v583 = vmul.f32 %v581, %v581
    %v584 = vmul.f32 %v582, %v582
    %v585 = vsel %vm34, %v583, 0.0
    %586 = vadd.xlane.f32.xlu0 %v585
    %v587 = vpop.xlane.xlu0 %586
    %v588 = vsel %vm34, %v584, 0.0
    %589 = vadd.xlane.f32.xlu0 %v588
    %v590 = vpop.xlane.xlu0 %589
    %v591 = vmul.f32 %v587, %v578
    %v592 = vmul.f32 %v590, %v578
    %v593 = vadd.f32 %v591, 1e-05
    %v594 = vadd.f32 %v592, 1e-05
    %v595 = vrsqrt.pop %v593
    %v596 = vrsqrt.pop %v594
    %v597 = vmul.f32 %v581, %v595
    %v598 = vmul.f32 %v582, %v596
    %v599 = vlaneseq
    %v600 = vshrl.u32 %v599, 7
    %v601 = vsub.s32 0, %v600
    %v602 = vrot.slane %v570, %v601
    %v603 = vmul.f32 %v597, %v602
    %v604 = vmul.f32 %v598, %v602
    %v605 = vlaneseq
    %v606 = vshrl.u32 %v605, 7
    %v607 = vsub.s32 0, %v606
    %v608 = vrot.slane %v571, %v607
    %v609 = vadd.f32 %v603, %v608
    %v610 = vadd.f32 %v604, %v608
    %v611 = vld [vmem:[%s1 + $0xc8] sm:$0xff]
    %v612 = vld [vmem:[%s1 + $0xd0] sm:$0xff]
    %v613 = vld [vmem:[%s1 + $0xd8] sm:$0xff]
    %v614 = vld [vmem:[%s1 + $0xe0] sm:$0xff]
    %v616 = vsel %vm34, %v609, 0
    %v619 = vsel %vm34, %v610, 0
    %621 = vmatprep.subr.mxu0 0.0
    %622 = vmatpush1.msra.mxu0 0.0
    %623 = vmatprep.subr.mxu0 0.0
    %624 = vmatpush1.msra.mxu0 0.0
    %625 = vmatprep.subr.mxu0 0.0
    %626 = vmatpush1.msra.mxu0 0.0
    %627 = vmatprep.subr.mxu0 0.0
    %628 = vmatpush1.msra.mxu0 0.0
    %629 = vmatprep.subr.mxu0 0.0
    %630 = vmatpush1.msra.mxu0 0.0
    %631 = vmatprep.subr.mxu0 0.0
    %632 = vmatpush1.msra.mxu0 0.0
    %633 = vmatprep.subr.mxu0 0.0
    %634 = vmatpush1.msra.mxu0 0.0
    %635 = vmatprep.subr.mxu0 0.0
    %636 = vmatpush1.msra.mxu0 0.0
    %637 = vmatprep.subr.mxu0 0.0
    %638 = vmatpush1.msra.mxu0 0.0
    %639 = vmatprep.subr.mxu0 0.0
    %640 = vmatpush1.msra.mxu0 0.0
    %641 = vmatprep.subr.mxu0 0.0
    %642 = vmatpush1.msra.mxu0 0.0
    %643 = vmatprep.subr.mxu0 0.0
    %644 = vmatpush1.msra.mxu0 0.0
    %645 = vmatprep.subr.mxu0 0.0
    %646 = vmatpush1.msra.mxu0 %v614
    %647 = vmatprep.subr.mxu0 0.0
    %648 = vmatpush1.msra.mxu0 %v613
    %649 = vmatprep.subr.mxu0 0.0
    %650 = vmatpush1.msra.mxu0 %v612
    %651 = vmatprep.subr.mxu0 0.0
    %652 = vmatpush1.msra.mxu0 %v611
    %653 = vmatprep.subr.mxu0 0.0
    %654 = vmatpush2.msra.mxu0 0.0
    %655 = vmatprep.subr.mxu0 0.0
    %656 = vmatpush2.msra.mxu0 0.0
    %657 = vmatprep.subr.mxu0 0.0
    %658 = vmatpush2.msra.mxu0 0.0
    %659 = vmatprep.subr.mxu0 0.0
    %660 = vmatpush2.msra.mxu0 0.0
    %661 = vmatprep.subr.mxu0 0.0
    %662 = vmatpush2.msra.mxu0 0.0
    %663 = vmatprep.subr.mxu0 0.0
    %664 = vmatpush2.msra.mxu0 0.0
    %665 = vmatprep.subr.mxu0 0.0
    %666 = vmatpush2.msra.mxu0 0.0
    %667 = vmatprep.subr.mxu0 0.0
    %668 = vmatpush2.msra.mxu0 0.0
    %669 = vmatprep.subr.mxu0 0.0
    %670 = vmatpush2.msra.mxu0 0.0
    %671 = vmatprep.subr.mxu0 0.0
    %672 = vmatpush2.msra.mxu0 0.0
    %673 = vmatprep.subr.mxu0 0.0
    %674 = vmatpush2.msra.mxu0 0.0
    %675 = vmatprep.subr.mxu0 0.0
    %676 = vmatpush2.msra.mxu0 0.0
    %677 = vmatprep.subr.mxu0 0.0
    %678 = vmatpush2.msra.mxu0 0.0
    %679 = vmatprep.subr.mxu0 0.0
    %680 = vmatpush2.msra.mxu0 0.0
    %681 = vmatprep.subr.mxu0 0.0
    %682 = vmatpush2.msra.mxu0 0.0
    %683 = vmatprep.subr.mxu0 0.0
    %684 = vmatpush2.msra.mxu0 0.0
    %685 = vmatprep.mubr.f32.mxu0 0.0
    %686 = vmatmul.mubr.f32.gmra.mxu0 %v616
    %v687 = vpop.f32.mrf.mxu0
    %v688 = vadd.f32 0.0, %v687
    %v689 = vpop.f32.mrf.mxu0
    %690 = vmatprep.mubr.f32.mxu0 0.0
    %691 = vmatmul.mubr.f32.gmra.mxu0 %v619
    %v692 = vpop.f32.mrf.mxu0
    %v693 = vadd.f32 0.0, %v692
    %v694 = vpop.f32.mrf.mxu0
    %695 = vdwg.mxu0
    %v696 = vld [vmem:[%s0 + $0x10] sm:$0xff]
    %v697 = vld [vmem:[%s0 + $0x18] sm:$0xff]
    %v698 = vld [vmem:[%s0 + $0x20] sm:$0xff]
    %v699 = vld [vmem:[%s0 + $0x28] sm:$0xff]
    %v700 = vld [vmem:[%s1 + $0xe8] sm:$0xff]
    %v701 = vld [vmem:[%s1 + $0xf0] sm:$0xff]
    %v702 = vld [vmem:[%s1 + $0xf8] sm:$0xff]
    %v703 = vld [vmem:[%s1 + $0x100] sm:$0xff]
    %v705 = vsel %vm34, %v696, 0
    %v708 = vsel %vm34, %v697, 0
    %v711 = vsel %vm34, %v698, 0
    %v714 = vsel %vm34, %v699, 0
    %716 = vmatprep.subr.mxu0 0.0
    %717 = vmatpush1.msra.mxu0 0.0
    %718 = vmatprep.subr.mxu0 0.0
    %719 = vmatpush1.msra.mxu0 0.0
    %720 = vmatprep.subr.mxu0 0.0
    %721 = vmatpush1.msra.mxu0 0.0
    %722 = vmatprep.subr.mxu0 0.0
    %723 = vmatpush1.msra.mxu0 0.0
    %724 = vmatprep.subr.mxu0 0.0
    %725 = vmatpush1.msra.mxu0 0.0
    %726 = vmatprep.subr.mxu0 0.0
    %727 = vmatpush1.msra.mxu0 0.0
    %728 = vmatprep.subr.mxu0 0.0
    %729 = vmatpush1.msra.mxu0 0.0
    %730 = vmatprep.subr.mxu0 0.0
    %731 = vmatpush1.msra.mxu0 0.0
    %732 = vmatprep.subr.mxu0 0.0
    %733 = vmatpush1.msra.mxu0 0.0
    %734 = vmatprep.subr.mxu0 0.0
    %735 = vmatpush1.msra.mxu0 0.0
    %736 = vmatprep.subr.mxu0 0.0
    %737 = vmatpush1.msra.mxu0 0.0
    %738 = vmatprep.subr.mxu0 0.0
    %739 = vmatpush1.msra.mxu0 0.0
    %740 = vmatprep.subr.mxu0 0.0
    %741 = vmatpush1.msra.mxu0 %v703
    %742 = vmatprep.subr.mxu0 0.0
    %743 = vmatpush1.msra.mxu0 %v702
    %744 = vmatprep.subr.mxu0 0.0
    %745 = vmatpush1.msra.mxu0 %v701
    %746 = vmatprep.subr.mxu0 0.0
    %747 = vmatpush1.msra.mxu0 %v700
    %748 = vmatprep.subr.mxu0 0.0
    %749 = vmatpush2.msra.mxu0 0.0
    %750 = vmatprep.subr.mxu0 0.0
    %751 = vmatpush2.msra.mxu0 0.0
    %752 = vmatprep.subr.mxu0 0.0
    %753 = vmatpush2.msra.mxu0 0.0
    %754 = vmatprep.subr.mxu0 0.0
    %755 = vmatpush2.msra.mxu0 0.0
    %756 = vmatprep.subr.mxu0 0.0
    %757 = vmatpush2.msra.mxu0 0.0
    %758 = vmatprep.subr.mxu0 0.0
    %759 = vmatpush2.msra.mxu0 0.0
    %760 = vmatprep.subr.mxu0 0.0
    %761 = vmatpush2.msra.mxu0 0.0
    %762 = vmatprep.subr.mxu0 0.0
    %763 = vmatpush2.msra.mxu0 0.0
    %764 = vmatprep.subr.mxu0 0.0
    %765 = vmatpush2.msra.mxu0 0.0
    %766 = vmatprep.subr.mxu0 0.0
    %767 = vmatpush2.msra.mxu0 0.0
    %768 = vmatprep.subr.mxu0 0.0
    %769 = vmatpush2.msra.mxu0 0.0
    %770 = vmatprep.subr.mxu0 0.0
    %771 = vmatpush2.msra.mxu0 0.0
    %772 = vmatprep.subr.mxu0 0.0
    %773 = vmatpush2.msra.mxu0 0.0
    %774 = vmatprep.subr.mxu0 0.0
    %775 = vmatpush2.msra.mxu0 0.0
    %776 = vmatprep.subr.mxu0 0.0
    %777 = vmatpush2.msra.mxu0 0.0
    %778 = vmatprep.subr.mxu0 0.0
    %779 = vmatpush2.msra.mxu0 0.0
    %780 = vmatprep.mubr.f32.mxu0 0.0
    %781 = vmatmul.mubr.f32.gmra.mxu0 %v705
    %v782 = vpop.f32.mrf.mxu0
    %v783 = vadd.f32 0.0, %v782
    %v784 = vpop.f32.mrf.mxu0
    %785 = vmatprep.mubr.f32.mxu0 0.0
    %786 = vmatmul.mubr.f32.gmra.mxu0 %v708
    %v787 = vpop.f32.mrf.mxu0
    %v788 = vadd.f32 0.0, %v787
    %v789 = vpop.f32.mrf.mxu0
    %790 = vmatprep.mubr.f32.mxu0 0.0
    %791 = vmatmul.mubr.f32.gmra.mxu0 %v711
    %v792 = vpop.f32.mrf.mxu0
    %v793 = vadd.f32 0.0, %v792
    %v794 = vpop.f32.mrf.mxu0
    %795 = vmatprep.mubr.f32.mxu0 0.0
    %796 = vmatmul.mubr.f32.gmra.mxu0 %v714
    %v797 = vpop.f32.mrf.mxu0
    %v798 = vadd.f32 0.0, %v797
    %v799 = vpop.f32.mrf.mxu0
    %800 = vdwg.mxu0
    %v801 = vsel %vm34, %v783, %v793
    %v802 = vsel %vm34, %v788, %v798
    %v803 = vld [vmem:[%s0 + $0x40] sm:$0xff]
    %v804 = vld [vmem:[%s0 + $0x48] sm:$0xff]
    %v805 = vld [vmem:[%s1 + $0x108] sm:$0xff]
    %v806 = vld [vmem:[%s1 + $0x110] sm:$0xff]
    %v807 = vld [vmem:[%s1 + $0x118] sm:$0xff]
    %v808 = vld [vmem:[%s1 + $0x120] sm:$0xff]
    %v809 = vld [vmem:[%s1 + $0x128] sm:$0x1]
    %v810 = vmul.f32 %v801, %v22
    %v811 = vmul.f32 %v802, %v23
    %v812 = vmul.f32 %v801, %v24
    %v813 = vmul.f32 %v802, %v25
    %v814 = vmul.f32 %v801, %v26
    %v815 = vmul.f32 %v802, %v27
    %v816 = vmul.f32 %v801, %v28
    %v817 = vmul.f32 %v802, %v29
    %v819 = vsel %vm34, %v688, 0
    %v822 = vsel %vm34, %v693, 0
    %v825 = vsel %vm34, %v810, 0
    %v828 = vsel %vm34, %v811, 0
    %v831 = vsel %vm34, %v812, 0
    %v834 = vsel %vm34, %v813, 0
    %v837 = vsel %vm34, %v814, 0
    %v840 = vsel %vm34, %v815, 0
    %v843 = vsel %vm34, %v816, 0
    %v846 = vsel %vm34, %v817, 0
    %848 = vmatprep.subr.mxu0 0.0
    %849 = vmatpush1.xpose.msra.mxu0 0.0
    %850 = vmatprep.subr.mxu0 0.0
    %851 = vmatpush1.xpose.msra.mxu0 0.0
    %852 = vmatprep.subr.mxu0 0.0
    %853 = vmatpush1.xpose.msra.mxu0 0.0
    %854 = vmatprep.subr.mxu0 0.0
    %855 = vmatpush1.xpose.msra.mxu0 0.0
    %856 = vmatprep.subr.mxu0 0.0
    %857 = vmatpush1.xpose.msra.mxu0 0.0
    %858 = vmatprep.subr.mxu0 0.0
    %859 = vmatpush1.xpose.msra.mxu0 0.0
    %860 = vmatprep.subr.mxu0 0.0
    %861 = vmatpush1.xpose.msra.mxu0 0.0
    %862 = vmatprep.subr.mxu0 0.0
    %863 = vmatpush1.xpose.msra.mxu0 0.0
    %864 = vmatprep.subr.mxu0 0.0
    %865 = vmatpush1.xpose.msra.mxu0 %v846
    %866 = vmatprep.subr.mxu0 0.0
    %867 = vmatpush1.xpose.msra.mxu0 %v843
    %868 = vmatprep.subr.mxu0 0.0
    %869 = vmatpush1.xpose.msra.mxu0 %v840
    %870 = vmatprep.subr.mxu0 0.0
    %871 = vmatpush1.xpose.msra.mxu0 %v837
    %872 = vmatprep.subr.mxu0 0.0
    %873 = vmatpush1.xpose.msra.mxu0 %v834
    %874 = vmatprep.subr.mxu0 0.0
    %875 = vmatpush1.xpose.msra.mxu0 %v831
    %876 = vmatprep.subr.mxu0 0.0
    %877 = vmatpush1.xpose.msra.mxu0 %v828
    %878 = vmatprep.subr.mxu0 0.0
    %879 = vmatpush1.xpose.msra.mxu0 %v825
    %880 = vmatprep.subr.mxu0 0.0
    %881 = vmatpush2.xpose.msra.mxu0 0.0
    %882 = vmatprep.subr.mxu0 0.0
    %883 = vmatpush2.xpose.msra.mxu0 0.0
    %884 = vmatprep.subr.mxu0 0.0
    %885 = vmatpush2.xpose.msra.mxu0 0.0
    %886 = vmatprep.subr.mxu0 0.0
    %887 = vmatpush2.xpose.msra.mxu0 0.0
    %888 = vmatprep.subr.mxu0 0.0
    %889 = vmatpush2.xpose.msra.mxu0 0.0
    %890 = vmatprep.subr.mxu0 0.0
    %891 = vmatpush2.xpose.msra.mxu0 0.0
    %892 = vmatprep.subr.mxu0 0.0
    %893 = vmatpush2.xpose.msra.mxu0 0.0
    %894 = vmatprep.subr.mxu0 0.0
    %895 = vmatpush2.xpose.msra.mxu0 0.0
    %896 = vmatprep.subr.mxu0 0.0
    %897 = vmatpush2.xpose.msra.mxu0 0.0
    %898 = vmatprep.subr.mxu0 0.0
    %899 = vmatpush2.xpose.msra.mxu0 0.0
    %900 = vmatprep.subr.mxu0 0.0
    %901 = vmatpush2.xpose.msra.mxu0 0.0
    %902 = vmatprep.subr.mxu0 0.0
    %903 = vmatpush2.xpose.msra.mxu0 0.0
    %904 = vmatprep.subr.mxu0 0.0
    %905 = vmatpush2.xpose.msra.mxu0 0.0
    %906 = vmatprep.subr.mxu0 0.0
    %907 = vmatpush2.xpose.msra.mxu0 0.0
    %908 = vmatprep.subr.mxu0 0.0
    %909 = vmatpush2.xpose.msra.mxu0 0.0
    %910 = vmatprep.subr.mxu0 0.0
    %911 = vmatpush2.xpose.msra.mxu0 0.0
    %912 = vmatprep.mubr.f32.mxu0 0.0
    %913 = vmatmul.mubr.f32.gmra.mxu0 %v819
    %v914 = vpop.f32.mrf.mxu0
    %v915 = vadd.f32 %v803, %v914
    %v916 = vpop.f32.mrf.mxu0
    %917 = vmatprep.mubr.f32.mxu0 0.0
    %918 = vmatmul.mubr.f32.gmra.mxu0 %v822
    %v919 = vpop.f32.mrf.mxu0
    %v920 = vadd.f32 %v804, %v919
    %v921 = vpop.f32.mrf.mxu0
    %922 = vdwg.mxu0
    %v923 = vsel %vm284, %v915, -inf
    %924 = vmax.xlane.f32.xlu0 %v923
    %v925 = vpop.xlane.xlu0 %924
    %v926 = vsel %vm284, %v920, -inf
    %927 = vmax.xlane.f32.xlu0 %v926
    %v928 = vpop.xlane.xlu0 %927
    %v929 = vsub.f32 %v915, %v925
    %v930 = vsub.f32 %v920, %v928
    %v931 = vmul.f32 %v929, 1.442695
    %v932 = vpow.pop %v931
    %v933 = vmul.f32 %v930, 1.442695
    %v934 = vpow.pop %v933
    %935 = vrot.lane.b32.xlu0 %v810, 96
    %v936 = vpop.permute.xlu0 %935
    %937 = vrot.lane.b32.xlu0 %v811, 96
    %v938 = vpop.permute.xlu0 %937
    %939 = vrot.lane.b32.xlu0 %v812, 96
    %v940 = vpop.permute.xlu0 %939
    %941 = vrot.lane.b32.xlu0 %v813, 96
    %v942 = vpop.permute.xlu0 %941
    %943 = vrot.lane.b32.xlu0 %v814, 96
    %v944 = vpop.permute.xlu0 %943
    %945 = vrot.lane.b32.xlu0 %v815, 96
    %v946 = vpop.permute.xlu0 %945
    %947 = vrot.lane.b32.xlu0 %v816, 96
    %v948 = vpop.permute.xlu0 %947
    %949 = vrot.lane.b32.xlu0 %v817, 96
    %v950 = vpop.permute.xlu0 %949
    %v960 = vsel %vm284, %v932, 0
    %v963 = vsel %vm284, %v934, 0
    %965 = vmatprep.subr.mxu0 0.0
    %966 = vmatpush1.msra.mxu0 0.0
    %967 = vmatprep.subr.mxu0 0.0
    %968 = vmatpush1.msra.mxu0 0.0
    %969 = vmatprep.subr.mxu0 0.0
    %970 = vmatpush1.msra.mxu0 0.0
    %971 = vmatprep.subr.mxu0 0.0
    %972 = vmatpush1.msra.mxu0 0.0
    %973 = vmatprep.subr.mxu0 0.0
    %974 = vmatpush1.msra.mxu0 0.0
    %975 = vmatprep.subr.mxu0 0.0
    %976 = vmatpush1.msra.mxu0 0.0
    %977 = vmatprep.subr.mxu0 0.0
    %978 = vmatpush1.msra.mxu0 0.0
    %979 = vmatprep.subr.mxu0 0.0
    %980 = vmatpush1.msra.mxu0 0.0
    %981 = vmatprep.subr.mxu0 0.0
    %982 = vmatpush1.msra.mxu0 %v950
    %983 = vmatprep.subr.mxu0 0.0
    %984 = vmatpush1.msra.mxu0 %v948
    %985 = vmatprep.subr.mxu0 0.0
    %986 = vmatpush1.msra.mxu0 %v946
    %987 = vmatprep.subr.mxu0 0.0
    %988 = vmatpush1.msra.mxu0 %v944
    %989 = vmatprep.subr.mxu0 0.0
    %990 = vmatpush1.msra.mxu0 %v942
    %991 = vmatprep.subr.mxu0 0.0
    %992 = vmatpush1.msra.mxu0 %v940
    %993 = vmatprep.subr.mxu0 0.0
    %994 = vmatpush1.msra.mxu0 %v938
    %995 = vmatprep.subr.mxu0 0.0
    %996 = vmatpush1.msra.mxu0 %v936
    %997 = vmatprep.subr.mxu0 0.0
    %998 = vmatpush2.msra.mxu0 0.0
    %999 = vmatprep.subr.mxu0 0.0
    %1000 = vmatpush2.msra.mxu0 0.0
    %1001 = vmatprep.subr.mxu0 0.0
    %1002 = vmatpush2.msra.mxu0 0.0
    %1003 = vmatprep.subr.mxu0 0.0
    %1004 = vmatpush2.msra.mxu0 0.0
    %1005 = vmatprep.subr.mxu0 0.0
    %1006 = vmatpush2.msra.mxu0 0.0
    %1007 = vmatprep.subr.mxu0 0.0
    %1008 = vmatpush2.msra.mxu0 0.0
    %1009 = vmatprep.subr.mxu0 0.0
    %1010 = vmatpush2.msra.mxu0 0.0
    %1011 = vmatprep.subr.mxu0 0.0
    %1012 = vmatpush2.msra.mxu0 0.0
    %1013 = vmatprep.subr.mxu0 0.0
    %1014 = vmatpush2.msra.mxu0 0.0
    %1015 = vmatprep.subr.mxu0 0.0
    %1016 = vmatpush2.msra.mxu0 0.0
    %1017 = vmatprep.subr.mxu0 0.0
    %1018 = vmatpush2.msra.mxu0 0.0
    %1019 = vmatprep.subr.mxu0 0.0
    %1020 = vmatpush2.msra.mxu0 0.0
    %1021 = vmatprep.subr.mxu0 0.0
    %1022 = vmatpush2.msra.mxu0 0.0
    %1023 = vmatprep.subr.mxu0 0.0
    %1024 = vmatpush2.msra.mxu0 0.0
    %1025 = vmatprep.subr.mxu0 0.0
    %1026 = vmatpush2.msra.mxu0 0.0
    %1027 = vmatprep.subr.mxu0 0.0
    %1028 = vmatpush2.msra.mxu0 0.0
    %1029 = vmatprep.mubr.f32.mxu0 0.0
    %1030 = vmatmul.mubr.f32.gmra.mxu0 %v960
    %v1031 = vpop.f32.mrf.mxu0
    %v1032 = vadd.f32 0.0, %v1031
    %v1033 = vpop.f32.mrf.mxu0
    %1034 = vmatprep.mubr.f32.mxu0 0.0
    %1035 = vmatmul.mubr.f32.gmra.mxu0 %v963
    %v1036 = vpop.f32.mrf.mxu0
    %v1037 = vadd.f32 0.0, %v1036
    %v1038 = vpop.f32.mrf.mxu0
    %1039 = vdwg.mxu0
    %1040 = vmatprep.subr.mxu0 0.0
    %1041 = vmatpush1.msra.mxu0 0.0
    %1042 = vmatprep.subr.mxu0 0.0
    %1043 = vmatpush1.msra.mxu0 0.0
    %1044 = vmatprep.subr.mxu0 0.0
    %1045 = vmatpush1.msra.mxu0 0.0
    %1046 = vmatprep.subr.mxu0 0.0
    %1047 = vmatpush1.msra.mxu0 0.0
    %1048 = vmatprep.subr.mxu0 0.0
    %1049 = vmatpush1.msra.mxu0 0.0
    %1050 = vmatprep.subr.mxu0 0.0
    %1051 = vmatpush1.msra.mxu0 0.0
    %1052 = vmatprep.subr.mxu0 0.0
    %1053 = vmatpush1.msra.mxu0 0.0
    %1054 = vmatprep.subr.mxu0 0.0
    %1055 = vmatpush1.msra.mxu0 0.0
    %1056 = vmatprep.subr.mxu0 0.0
    %1057 = vmatpush1.msra.mxu0 %v21
    %1058 = vmatprep.subr.mxu0 0.0
    %1059 = vmatpush1.msra.mxu0 %v20
    %1060 = vmatprep.subr.mxu0 0.0
    %1061 = vmatpush1.msra.mxu0 %v19
    %1062 = vmatprep.subr.mxu0 0.0
    %1063 = vmatpush1.msra.mxu0 %v18
    %1064 = vmatprep.subr.mxu0 0.0
    %1065 = vmatpush1.msra.mxu0 %v17
    %1066 = vmatprep.subr.mxu0 0.0
    %1067 = vmatpush1.msra.mxu0 %v16
    %1068 = vmatprep.subr.mxu0 0.0
    %1069 = vmatpush1.msra.mxu0 %v15
    %1070 = vmatprep.subr.mxu0 0.0
    %1071 = vmatpush1.msra.mxu0 %v14
    %1072 = vmatprep.subr.mxu0 0.0
    %1073 = vmatpush2.msra.mxu0 0.0
    %1074 = vmatprep.subr.mxu0 0.0
    %1075 = vmatpush2.msra.mxu0 0.0
    %1076 = vmatprep.subr.mxu0 0.0
    %1077 = vmatpush2.msra.mxu0 0.0
    %1078 = vmatprep.subr.mxu0 0.0
    %1079 = vmatpush2.msra.mxu0 0.0
    %1080 = vmatprep.subr.mxu0 0.0
    %1081 = vmatpush2.msra.mxu0 0.0
    %1082 = vmatprep.subr.mxu0 0.0
    %1083 = vmatpush2.msra.mxu0 0.0
    %1084 = vmatprep.subr.mxu0 0.0
    %1085 = vmatpush2.msra.mxu0 0.0
    %1086 = vmatprep.subr.mxu0 0.0
    %1087 = vmatpush2.msra.mxu0 0.0
    %1088 = vmatprep.subr.mxu0 0.0
    %1089 = vmatpush2.msra.mxu0 0.0
    %1090 = vmatprep.subr.mxu0 0.0
    %1091 = vmatpush2.msra.mxu0 0.0
    %1092 = vmatprep.subr.mxu0 0.0
    %1093 = vmatpush2.msra.mxu0 0.0
    %1094 = vmatprep.subr.mxu0 0.0
    %1095 = vmatpush2.msra.mxu0 0.0
    %1096 = vmatprep.subr.mxu0 0.0
    %1097 = vmatpush2.msra.mxu0 0.0
    %1098 = vmatprep.subr.mxu0 0.0
    %1099 = vmatpush2.msra.mxu0 0.0
    %1100 = vmatprep.subr.mxu0 0.0
    %1101 = vmatpush2.msra.mxu0 0.0
    %1102 = vmatprep.subr.mxu0 0.0
    %1103 = vmatpush2.msra.mxu0 0.0
    %1104 = vmatprep.mubr.f32.mxu0 0.0
    %1105 = vmatmul.mubr.f32.gmra.mxu0 %v960
    %v1106 = vpop.f32.mrf.mxu0
    %v1107 = vadd.f32 0.0, %v1106
    %v1108 = vpop.f32.mrf.mxu0
    %1109 = vmatprep.mubr.f32.mxu0 0.0
    %1110 = vmatmul.mubr.f32.gmra.mxu0 %v963
    %v1111 = vpop.f32.mrf.mxu0
    %v1112 = vadd.f32 0.0, %v1111
    %v1113 = vpop.f32.mrf.mxu0
    %1114 = vdwg.mxu0
    %v1115 = vmax.f32 %v1107, 1e-30
    %v1116 = vmax.f32 %v1112, 1e-30
    %v1117 = vrcp.pop %v1115
    %v1118 = vrcp.pop %v1116
    %v1119 = vmul.f32 %v1032, %v1117
    %v1120 = vmul.f32 %v1037, %v1118
    %v1121 = vlaneseq
    %v1122 = vshrl.u32 %v1121, 7
    %v1123 = vsub.s32 0, %v1122
    %v1124 = vrot.slane %v809, %v1123
    %v1126 = vsel %vm34, %v1119, 0
    %v1129 = vsel %vm34, %v1120, 0
    %1131 = vmatprep.subr.mxu0 0.0
    %1132 = vmatpush1.msra.mxu0 0.0
    %1133 = vmatprep.subr.mxu0 0.0
    %1134 = vmatpush1.msra.mxu0 0.0
    %1135 = vmatprep.subr.mxu0 0.0
    %1136 = vmatpush1.msra.mxu0 0.0
    %1137 = vmatprep.subr.mxu0 0.0
    %1138 = vmatpush1.msra.mxu0 0.0
    %1139 = vmatprep.subr.mxu0 0.0
    %1140 = vmatpush1.msra.mxu0 0.0
    %1141 = vmatprep.subr.mxu0 0.0
    %1142 = vmatpush1.msra.mxu0 0.0
    %1143 = vmatprep.subr.mxu0 0.0
    %1144 = vmatpush1.msra.mxu0 0.0
    %1145 = vmatprep.subr.mxu0 0.0
    %1146 = vmatpush1.msra.mxu0 0.0
    %1147 = vmatprep.subr.mxu0 0.0
    %1148 = vmatpush1.msra.mxu0 0.0
    %1149 = vmatprep.subr.mxu0 0.0
    %1150 = vmatpush1.msra.mxu0 0.0
    %1151 = vmatprep.subr.mxu0 0.0
    %1152 = vmatpush1.msra.mxu0 0.0
    %1153 = vmatprep.subr.mxu0 0.0
    %1154 = vmatpush1.msra.mxu0 0.0
    %1155 = vmatprep.subr.mxu0 0.0
    %1156 = vmatpush1.msra.mxu0 %v808
    %1157 = vmatprep.subr.mxu0 0.0
    %1158 = vmatpush1.msra.mxu0 %v807
    %1159 = vmatprep.subr.mxu0 0.0
    %1160 = vmatpush1.msra.mxu0 %v806
    %1161 = vmatprep.subr.mxu0 0.0
    %1162 = vmatpush1.msra.mxu0 %v805
    %1163 = vmatprep.subr.mxu0 0.0
    %1164 = vmatpush2.msra.mxu0 0.0
    %1165 = vmatprep.subr.mxu0 0.0
    %1166 = vmatpush2.msra.mxu0 0.0
    %1167 = vmatprep.subr.mxu0 0.0
    %1168 = vmatpush2.msra.mxu0 0.0
    %1169 = vmatprep.subr.mxu0 0.0
    %1170 = vmatpush2.msra.mxu0 0.0
    %1171 = vmatprep.subr.mxu0 0.0
    %1172 = vmatpush2.msra.mxu0 0.0
    %1173 = vmatprep.subr.mxu0 0.0
    %1174 = vmatpush2.msra.mxu0 0.0
    %1175 = vmatprep.subr.mxu0 0.0
    %1176 = vmatpush2.msra.mxu0 0.0
    %1177 = vmatprep.subr.mxu0 0.0
    %1178 = vmatpush2.msra.mxu0 0.0
    %1179 = vmatprep.subr.mxu0 0.0
    %1180 = vmatpush2.msra.mxu0 0.0
    %1181 = vmatprep.subr.mxu0 0.0
    %1182 = vmatpush2.msra.mxu0 0.0
    %1183 = vmatprep.subr.mxu0 0.0
    %1184 = vmatpush2.msra.mxu0 0.0
    %1185 = vmatprep.subr.mxu0 0.0
    %1186 = vmatpush2.msra.mxu0 0.0
    %1187 = vmatprep.subr.mxu0 0.0
    %1188 = vmatpush2.msra.mxu0 0.0
    %1189 = vmatprep.subr.mxu0 0.0
    %1190 = vmatpush2.msra.mxu0 0.0
    %1191 = vmatprep.subr.mxu0 0.0
    %1192 = vmatpush2.msra.mxu0 0.0
    %1193 = vmatprep.subr.mxu0 0.0
    %1194 = vmatpush2.msra.mxu0 0.0
    %1195 = vmatprep.mubr.f32.mxu0 0.0
    %1196 = vmatmul.mubr.f32.gmra.mxu0 %v1126
    %v1197 = vpop.f32.mrf.mxu0
    %v1198 = vadd.f32 %v1124, %v1197
    %v1199 = vpop.f32.mrf.mxu0
    %1200 = vmatprep.mubr.f32.mxu0 0.0
    %1201 = vmatmul.mubr.f32.gmra.mxu0 %v1129
    %v1202 = vpop.f32.mrf.mxu0
    %v1203 = vadd.f32 %v1124, %v1202
    %v1204 = vpop.f32.mrf.mxu0
    %1205 = vdwg.mxu0
    %v1206 = vadd.f32 %v1198, %v609
    %v1207 = vadd.f32 %v1203, %v610
    %v1208 = vld [vmem:[%s1 + $0x1e8] sm:$0x1]
    %v1209 = vld [vmem:[%s1 + $0x200] sm:$0x1]
    %v1210 = vsel %vm34, %v1206, 0.0
    %1211 = vadd.xlane.f32.xlu0 %v1210
    %v1212 = vpop.xlane.xlu0 %1211
    %v1213 = vsel %vm34, %v1207, 0.0
    %1214 = vadd.xlane.f32.xlu0 %v1213
    %v1215 = vpop.xlane.xlu0 %1214
    %v1216 = vmul.f32 %v1212, %v578
    %v1217 = vmul.f32 %v1215, %v578
    %v1218 = vsub.f32 %v1206, %v1216
    %v1219 = vsub.f32 %v1207, %v1217
    %v1220 = vmul.f32 %v1218, %v1218
    %v1221 = vmul.f32 %v1219, %v1219
    %v1222 = vsel %vm34, %v1220, 0.0
    %1223 = vadd.xlane.f32.xlu0 %v1222
    %v1224 = vpop.xlane.xlu0 %1223
    %v1225 = vsel %vm34, %v1221, 0.0
    %1226 = vadd.xlane.f32.xlu0 %v1225
    %v1227 = vpop.xlane.xlu0 %1226
    %v1228 = vmul.f32 %v1224, %v578
    %v1229 = vmul.f32 %v1227, %v578
    %v1230 = vadd.f32 %v1228, 1e-05
    %v1231 = vadd.f32 %v1229, 1e-05
    %v1232 = vrsqrt.pop %v1230
    %v1233 = vrsqrt.pop %v1231
    %v1234 = vmul.f32 %v1218, %v1232
    %v1235 = vmul.f32 %v1219, %v1233
    %v1236 = vlaneseq
    %v1237 = vshrl.u32 %v1236, 7
    %v1238 = vsub.s32 0, %v1237
    %v1239 = vrot.slane %v1208, %v1238
    %v1240 = vmul.f32 %v1234, %v1239
    %v1241 = vmul.f32 %v1235, %v1239
    %v1242 = vlaneseq
    %v1243 = vshrl.u32 %v1242, 7
    %v1244 = vsub.s32 0, %v1243
    %v1245 = vrot.slane %v1209, %v1244
    %v1246 = vadd.f32 %v1240, %v1245
    %v1247 = vadd.f32 %v1241, %v1245
    %v1248 = vld [vmem:[%s1 + $0x130] sm:$0xff]
    %v1249 = vld [vmem:[%s1 + $0x138] sm:$0xff]
    %v1250 = vld [vmem:[%s1 + $0x140] sm:$0xff]
    %v1251 = vld [vmem:[%s1 + $0x148] sm:$0xff]
    %v1252 = vld [vmem:[%s1 + $0x150] sm:$0x1]
    %v1253 = vlaneseq
    %v1254 = vshrl.u32 %v1253, 7
    %v1255 = vsub.s32 0, %v1254
    %v1256 = vrot.slane %v1252, %v1255
    %v1258 = vsel %vm34, %v1246, 0
    %v1261 = vsel %vm34, %v1247, 0
    %1263 = vmatprep.subr.mxu0 0.0
    %1264 = vmatpush1.msra.mxu0 0.0
    %1265 = vmatprep.subr.mxu0 0.0
    %1266 = vmatpush1.msra.mxu0 0.0
    %1267 = vmatprep.subr.mxu0 0.0
    %1268 = vmatpush1.msra.mxu0 0.0
    %1269 = vmatprep.subr.mxu0 0.0
    %1270 = vmatpush1.msra.mxu0 0.0
    %1271 = vmatprep.subr.mxu0 0.0
    %1272 = vmatpush1.msra.mxu0 0.0
    %1273 = vmatprep.subr.mxu0 0.0
    %1274 = vmatpush1.msra.mxu0 0.0
    %1275 = vmatprep.subr.mxu0 0.0
    %1276 = vmatpush1.msra.mxu0 0.0
    %1277 = vmatprep.subr.mxu0 0.0
    %1278 = vmatpush1.msra.mxu0 0.0
    %1279 = vmatprep.subr.mxu0 0.0
    %1280 = vmatpush1.msra.mxu0 0.0
    %1281 = vmatprep.subr.mxu0 0.0
    %1282 = vmatpush1.msra.mxu0 0.0
    %1283 = vmatprep.subr.mxu0 0.0
    %1284 = vmatpush1.msra.mxu0 0.0
    %1285 = vmatprep.subr.mxu0 0.0
    %1286 = vmatpush1.msra.mxu0 0.0
    %1287 = vmatprep.subr.mxu0 0.0
    %1288 = vmatpush1.msra.mxu0 %v1251
    %1289 = vmatprep.subr.mxu0 0.0
    %1290 = vmatpush1.msra.mxu0 %v1250
    %1291 = vmatprep.subr.mxu0 0.0
    %1292 = vmatpush1.msra.mxu0 %v1249
    %1293 = vmatprep.subr.mxu0 0.0
    %1294 = vmatpush1.msra.mxu0 %v1248
    %1295 = vmatprep.subr.mxu0 0.0
    %1296 = vmatpush2.msra.mxu0 0.0
    %1297 = vmatprep.subr.mxu0 0.0
    %1298 = vmatpush2.msra.mxu0 0.0
    %1299 = vmatprep.subr.mxu0 0.0
    %1300 = vmatpush2.msra.mxu0 0.0
    %1301 = vmatprep.subr.mxu0 0.0
    %1302 = vmatpush2.msra.mxu0 0.0
    %1303 = vmatprep.subr.mxu0 0.0
    %1304 = vmatpush2.msra.mxu0 0.0
    %1305 = vmatprep.subr.mxu0 0.0
    %1306 = vmatpush2.msra.mxu0 0.0
    %1307 = vmatprep.subr.mxu0 0.0
    %1308 = vmatpush2.msra.mxu0 0.0
    %1309 = vmatprep.subr.mxu0 0.0
    %1310 = vmatpush2.msra.mxu0 0.0
    %1311 = vmatprep.subr.mxu0 0.0
    %1312 = vmatpush2.msra.mxu0 0.0
    %1313 = vmatprep.subr.mxu0 0.0
    %1314 = vmatpush2.msra.mxu0 0.0
    %1315 = vmatprep.subr.mxu0 0.0
    %1316 = vmatpush2.msra.mxu0 0.0
    %1317 = vmatprep.subr.mxu0 0.0
    %1318 = vmatpush2.msra.mxu0 0.0
    %1319 = vmatprep.subr.mxu0 0.0
    %1320 = vmatpush2.msra.mxu0 0.0
    %1321 = vmatprep.subr.mxu0 0.0
    %1322 = vmatpush2.msra.mxu0 0.0
    %1323 = vmatprep.subr.mxu0 0.0
    %1324 = vmatpush2.msra.mxu0 0.0
    %1325 = vmatprep.subr.mxu0 0.0
    %1326 = vmatpush2.msra.mxu0 0.0
    %1327 = vmatprep.mubr.f32.mxu0 0.0
    %1328 = vmatmul.mubr.f32.gmra.mxu0 %v1258
    %v1329 = vpop.f32.mrf.mxu0
    %v1330 = vadd.f32 %v1256, %v1329
    %v1331 = vpop.f32.mrf.mxu0
    %1332 = vmatprep.mubr.f32.mxu0 0.0
    %1333 = vmatmul.mubr.f32.gmra.mxu0 %v1261
    %v1334 = vpop.f32.mrf.mxu0
    %v1335 = vadd.f32 %v1256, %v1334
    %v1336 = vpop.f32.mrf.mxu0
    %1337 = vdwg.mxu0
    %v1338 = vmax.f32 %v1330, 0.0
    %v1339 = vmax.f32 %v1335, 0.0
    %v1340 = vld [vmem:[%s1 + $0x158] sm:$0xff]
    %v1341 = vld [vmem:[%s1 + $0x160] sm:$0xff]
    %v1342 = vld [vmem:[%s1 + $0x168] sm:$0xff]
    %v1343 = vld [vmem:[%s1 + $0x170] sm:$0xff]
    %v1344 = vld [vmem:[%s1 + $0x178] sm:$0xff]
    %v1345 = vld [vmem:[%s1 + $0x180] sm:$0xff]
    %v1346 = vld [vmem:[%s1 + $0x188] sm:$0xff]
    %v1347 = vld [vmem:[%s1 + $0x190] sm:$0xff]
    %v1348 = vld [vmem:[%s1 + $0x198] sm:$0xff]
    %v1349 = vld [vmem:[%s1 + $0x1a0] sm:$0xff]
    %v1350 = vld [vmem:[%s1 + $0x1a8] sm:$0xff]
    %v1351 = vld [vmem:[%s1 + $0x1b0] sm:$0xff]
    %v1352 = vld [vmem:[%s1 + $0x1b8] sm:$0xff]
    %v1353 = vld [vmem:[%s1 + $0x1c0] sm:$0xff]
    %v1354 = vld [vmem:[%s1 + $0x1c8] sm:$0xff]
    %v1355 = vld [vmem:[%s1 + $0x1d0] sm:$0xff]
    %v1356 = vld [vmem:[%s1 + $0x1d8] sm:$0x1]
    %v1357 = vlaneseq
    %v1358 = vshrl.u32 %v1357, 7
    %v1359 = vsub.s32 0, %v1358
    %v1360 = vrot.slane %v1356, %v1359
    %1361 = vmatprep.subr.mxu0 0.0
    %1362 = vmatpush1.msra.mxu0 %v1355
    %1363 = vmatprep.subr.mxu0 0.0
    %1364 = vmatpush1.msra.mxu0 %v1354
    %1365 = vmatprep.subr.mxu0 0.0
    %1366 = vmatpush1.msra.mxu0 %v1353
    %1367 = vmatprep.subr.mxu0 0.0
    %1368 = vmatpush1.msra.mxu0 %v1352
    %1369 = vmatprep.subr.mxu0 0.0
    %1370 = vmatpush1.msra.mxu0 %v1351
    %1371 = vmatprep.subr.mxu0 0.0
    %1372 = vmatpush1.msra.mxu0 %v1350
    %1373 = vmatprep.subr.mxu0 0.0
    %1374 = vmatpush1.msra.mxu0 %v1349
    %1375 = vmatprep.subr.mxu0 0.0
    %1376 = vmatpush1.msra.mxu0 %v1348
    %1377 = vmatprep.subr.mxu0 0.0
    %1378 = vmatpush1.msra.mxu0 %v1347
    %1379 = vmatprep.subr.mxu0 0.0
    %1380 = vmatpush1.msra.mxu0 %v1346
    %1381 = vmatprep.subr.mxu0 0.0
    %1382 = vmatpush1.msra.mxu0 %v1345
    %1383 = vmatprep.subr.mxu0 0.0
    %1384 = vmatpush1.msra.mxu0 %v1344
    %1385 = vmatprep.subr.mxu0 0.0
    %1386 = vmatpush1.msra.mxu0 %v1343
    %1387 = vmatprep.subr.mxu0 0.0
    %1388 = vmatpush1.msra.mxu0 %v1342
    %1389 = vmatprep.subr.mxu0 0.0
    %1390 = vmatpush1.msra.mxu0 %v1341
    %1391 = vmatprep.subr.mxu0 0.0
    %1392 = vmatpush1.msra.mxu0 %v1340
    %1393 = vmatprep.subr.mxu0 0.0
    %1394 = vmatpush2.msra.mxu0 0.0
    %1395 = vmatprep.subr.mxu0 0.0
    %1396 = vmatpush2.msra.mxu0 0.0
    %1397 = vmatprep.subr.mxu0 0.0
    %1398 = vmatpush2.msra.mxu0 0.0
    %1399 = vmatprep.subr.mxu0 0.0
    %1400 = vmatpush2.msra.mxu0 0.0
    %1401 = vmatprep.subr.mxu0 0.0
    %1402 = vmatpush2.msra.mxu0 0.0
    %1403 = vmatprep.subr.mxu0 0.0
    %1404 = vmatpush2.msra.mxu0 0.0
    %1405 = vmatprep.subr.mxu0 0.0
    %1406 = vmatpush2.msra.mxu0 0.0
    %1407 = vmatprep.subr.mxu0 0.0
    %1408 = vmatpush2.msra.mxu0 0.0
    %1409 = vmatprep.subr.mxu0 0.0
    %1410 = vmatpush2.msra.mxu0 0.0
    %1411 = vmatprep.subr.mxu0 0.0
    %1412 = vmatpush2.msra.mxu0 0.0
    %1413 = vmatprep.subr.mxu0 0.0
    %1414 = vmatpush2.msra.mxu0 0.0
    %1415 = vmatprep.subr.mxu0 0.0
    %1416 = vmatpush2.msra.mxu0 0.0
    %1417 = vmatprep.subr.mxu0 0.0
    %1418 = vmatpush2.msra.mxu0 0.0
    %1419 = vmatprep.subr.mxu0 0.0
    %1420 = vmatpush2.msra.mxu0 0.0
    %1421 = vmatprep.subr.mxu0 0.0
    %1422 = vmatpush2.msra.mxu0 0.0
    %1423 = vmatprep.subr.mxu0 0.0
    %1424 = vmatpush2.msra.mxu0 0.0
    %1425 = vmatprep.mubr.f32.mxu0 0.0
    %1426 = vmatmul.mubr.f32.gmra.mxu0 %v1338
    %v1427 = vpop.f32.mrf.mxu0
    %v1428 = vadd.f32 %v1360, %v1427
    %v1429 = vpop.f32.mrf.mxu0
    %1430 = vmatprep.mubr.f32.mxu0 0.0
    %1431 = vmatmul.mubr.f32.gmra.mxu0 %v1339
    %v1432 = vpop.f32.mrf.mxu0
    %v1433 = vadd.f32 %v1360, %v1432
    %v1434 = vpop.f32.mrf.mxu0
    %1435 = vdwg.mxu0
    %v1436 = vadd.f32 %v1428, %v1246
    %v1437 = vadd.f32 %v1433, %v1247
    %v1438 = vld [vmem:[%s1 + $0x1f0] sm:$0x1]
    %v1439 = vld [vmem:[%s1 + $0x208] sm:$0x1]
    %v1440 = vsel %vm34, %v1436, 0.0
    %1441 = vadd.xlane.f32.xlu0 %v1440
    %v1442 = vpop.xlane.xlu0 %1441
    %v1443 = vsel %vm34, %v1437, 0.0
    %1444 = vadd.xlane.f32.xlu0 %v1443
    %v1445 = vpop.xlane.xlu0 %1444
    %v1446 = vmul.f32 %v1442, %v578
    %v1447 = vmul.f32 %v1445, %v578
    %v1448 = vsub.f32 %v1436, %v1446
    %v1449 = vsub.f32 %v1437, %v1447
    %v1450 = vmul.f32 %v1448, %v1448
    %v1451 = vmul.f32 %v1449, %v1449
    %v1452 = vsel %vm34, %v1450, 0.0
    %1453 = vadd.xlane.f32.xlu0 %v1452
    %v1454 = vpop.xlane.xlu0 %1453
    %v1455 = vsel %vm34, %v1451, 0.0
    %1456 = vadd.xlane.f32.xlu0 %v1455
    %v1457 = vpop.xlane.xlu0 %1456
    %v1458 = vmul.f32 %v1454, %v578
    %v1459 = vmul.f32 %v1457, %v578
    %v1460 = vadd.f32 %v1458, 1e-05
    %v1461 = vadd.f32 %v1459, 1e-05
    %v1462 = vrsqrt.pop %v1460
    %v1463 = vrsqrt.pop %v1461
    %v1464 = vmul.f32 %v1448, %v1462
    %v1465 = vmul.f32 %v1449, %v1463
    %v1466 = vlaneseq
    %v1467 = vshrl.u32 %v1466, 7
    %v1468 = vsub.s32 0, %v1467
    %v1469 = vrot.slane %v1438, %v1468
    %v1470 = vmul.f32 %v1464, %v1469
    %v1471 = vmul.f32 %v1465, %v1469
    %v1472 = vlaneseq
    %v1473 = vshrl.u32 %v1472, 7
    %v1474 = vsub.s32 0, %v1473
    %v1475 = vrot.slane %v1439, %v1474
    %v1476 = vadd.f32 %v1470, %v1475
    %v1477 = vadd.f32 %v1471, %v1475
    %1478 = vst.msk [vmem:[#allocation2] sm:$0xff] %vm34, %v1476
    %1479 = vst.msk [vmem:[#allocation2 + $0x8] sm:$0xff] %vm34, %v1477
    // Predicated region
    $region10: #{decoder_block.1} parent=1 // pred_check
      _
    $region11: #{decoder_block.1} parent=1 // pred_check_branch
      %1481 = sbr.rel (0) target = $region13
    $region12: #{decoder_block.1} parent=1 // pred_region
      %s1483 = ssub.s32 256, 256
      %1484 = vsyncadd [#allocation3], %s1483
      %s1485 = sshll.u32 [#allocation2], 4
      %s1486 = int_to_ptr.vmem [resolvable:$true] %s1485
      %1491 = dma.vmem_to_hbm [thread:$0]  %s1486, 256, %s2, [#allocation3], 128, 128, 8
    $region13: #{decoder_block.1} parent=1 // pred_fallthru
      _
    // Predicated region
    $region14: #{decoder_block.1} parent=1 // pred_check
      _
    $region15: #{decoder_block.1} parent=1 // pred_check_branch
      %1493 = sbr.rel (0) target = $region17
    $region16: #{decoder_block.1} parent=1 // pred_region
      %1494 = dma.done [#allocation3], 256
    $region17: #{decoder_block.1} parent=1 // pred_fallthru
      _
    %1495 = vsyncpa [#allocation3], 1

</llo_original>
